<compile_context>
chip_gen: v7x
topology: tpu7x:2x2x1
jax: 0.10.0
libtpu: 0.0.40
codegen_flags: <defaults>
</compile_context>

<pallas_src>
import functools

import jax
import jax.numpy as jnp
import numpy as np
from jax import lax
from jax.experimental import pallas as pl
from jax.experimental.pallas import tpu as pltpu

# ---- hyper-parameters (the PyTorch module reads these from global `args`) ----
FEAT_SOFT_TOKEN_RATE = 0.1
SOFT_TOKEN_RATE = 0.1
MODEL_CAT_RATE = 0.55
EPS = 1e-12

# ------------------------------ tiling config ---------------------------------
# Generation-independent caps.  Worst per-step footprint (bf16 in, f32 out,
# double-buffered) at (tm,tk,tn)=(1024,1024,512) is ~10 MiB.
_TM = 512            # default M tile
_TM_BIG = 1024       # M tile when the whole RHS fits a single lane tile
_TN = 512            # N tile cap (non-softmax)
_TK = 1024           # K tile
_TM_ELT = 2048       # rows per step for elementwise kernels


def _vmem_limit_bytes():
    # Only the scoped-VMEM request is generation dependent; the fallback never
    # changes tile sizes and is safe everywhere (footprint ~10 MiB << 48 MiB).
    try:
        phys = int(pltpu.get_tpu_info().vmem_capacity_bytes)
    except Exception:
        phys = 64 * 1024 * 1024
    return min(96 * 1024 * 1024, (phys * 3) // 4)


_VMEM_LIMIT = _vmem_limit_bytes()


def _round_up(x, m):
    return ((x + m - 1) // m) * m


def _pad2(x, rows, cols):
    r, c = x.shape
    if r == rows and c == cols:
        return x
    return jnp.pad(x, ((0, rows - r), (0, cols - c)))


def _pick_tm(M, single_n_tile):
    m16 = _round_up(M, 16)
    if single_n_tile and m16 >= 2 * _TM_BIG:
        # Single RHS lane-tile: the RHS is re-streamed once per M tile, so a
        # larger tm cuts that redundant traffic (~tn/tm of the A stream) while
        # keeping >= 2 row tiles for v7x megacore sharding.
        return _TM_BIG
    return min(_TM, m16)


# =============================== Pallas kernels ===============================

def _matmul_kernel(a_ref, b_ref, o_ref, *, do_softmax, n_valid):
    """Tiled A@B, accumulating directly into the resident f32 output block."""
    @pl.when(pl.program_id(2) == 0)
    def _():
        o_ref[...] = jnp.zeros_like(o_ref)

    o_ref[...] += jnp.dot(a_ref[...], b_ref[...],
                          preferred_element_type=jnp.float32)

    if do_softmax:
        @pl.when(pl.program_id(2) == pl.num_programs(2) - 1)
        def _():
            acc = o_ref[...]
            # Softmax spans the whole (un-padded) row: mask padded lanes.
            col = lax.broadcasted_iota(jnp.int32, acc.shape, 1)
            acc = jnp.where(col < n_valid, acc, -jnp.inf)
            m = jnp.max(acc, axis=-1, keepdims=True)
            e = jnp.exp(acc - m)
            s = jnp.sum(e, axis=-1, keepdims=True)
            o_ref[...] = e / s


def _matmul_call(a_pad, M, K, b, *, tm, tk, softmax):
    """Run the tiled matmul on an already cast/padded bf16 LHS."""
    Mp, Kp = a_pad.shape
    N = b.shape[1]
    if softmax:
        tn = _round_up(N, 128)                  # whole row in one block
    else:
        tn = min(_TN, _round_up(N, 128))
    Np = _round_up(N, tn)
    if softmax:
        assert tn == Np, "softmax column mask assumes a single N tile"
    b_pad = _pad2(b.astype(jnp.bfloat16), Kp, Np)
    out = pl.pallas_call(
        functools.partial(_matmul_kernel, do_softmax=softmax, n_valid=N),
        out_shape=jax.ShapeDtypeStruct((Mp, Np), jnp.float32),
        grid=(Mp // tm, Np // tn, Kp // tk),
        in_specs=[pl.BlockSpec((tm, tk), lambda i, j, k: (i, k)),
                  pl.BlockSpec((tk, tn), lambda i, j, k: (k, j))],
        out_specs=pl.BlockSpec((tm, tn), lambda i, j, k: (i, j)),
        compiler_params=pltpu.CompilerParams(
            dimension_semantics=("parallel", "parallel", "arbitrary"),
            vmem_limit_bytes=_VMEM_LIMIT),
    )(a_pad, b_pad)
    return out[:M, :N]


def make_graph_mm(graph):
    """Cast->bf16 + pad a graph operand ONCE; reuse it for every GNN hop."""
    M, K = graph.shape
    # Every hop RHS has <= 3*embedding_dim columns -> a single lane tile.
    tm = _pick_tm(M, single_n_tile=True)
    tk = min(_TK, _round_up(K, 128))
    g_pad = _pad2(graph.astype(jnp.bfloat16), _round_up(M, tm), _round_up(K, tk))

    def mm(rhs, *, softmax=False):
        return _matmul_call(g_pad, M, K, rhs, tm=tm, tk=tk, softmax=softmax)

    return mm


def pl_matmul(a, b, *, softmax=False):
    """o = a @ b (bf16 MXU operands, f32 accumulation), one-shot operands."""
    M, K = a.shape
    N = b.shape[1]
    tn = _round_up(N, 128) if softmax else min(_TN, _round_up(N, 128))
    tm = _pick_tm(M, single_n_tile=(_round_up(N, tn) == tn))
    tk = min(_TK, _round_up(K, 128))
    a_pad = _pad2(a.astype(jnp.bfloat16), _round_up(M, tm), _round_up(K, tk))
    return _matmul_call(a_pad, M, K, b, tm=tm, tk=tk, softmax=softmax)


def _linear_kernel(x_ref, wt_ref, b_ref, o_ref):
    # y = x @ w.T + b with w pre-transposed to (K, Dout): plain MXU dot.
    o_ref[...] = jnp.dot(x_ref[...], wt_ref[...],
                         preferred_element_type=jnp.float32) + b_ref[...]


def _linear_prompt_kernel(x_ref, pf_ref, wt_ref, b_ref, o_ref, *, scale):
    # y = (x + scale * row_normalize(pf)) @ w.T + b -- rownorm fused in.
    # Inputs stream as bf16; the rownorm/add runs in f32 in-kernel.
    pf = pf_ref[...].astype(jnp.float32)
    inv = lax.rsqrt(jnp.maximum(jnp.sum(pf * pf, axis=1, keepdims=True),
                                EPS * EPS))
    xin = (x_ref[...].astype(jnp.float32) + scale * (pf * inv)).astype(jnp.bfloat16)
    o_ref[...] = jnp.dot(xin, wt_ref[...],
                         preferred_element_type=jnp.float32) + b_ref[...]


def pl_linear(x, w, b, *, prompt_feat=None, prompt_scale=0.0):
    """torch.nn.Linear (w: (out, in)), optionally fused with the prompt rownorm."""
    M, K = x.shape
    Dout = w.shape[0]
    tm = min(_TM, _round_up(M, 16))
    Mp, Kp, Dp = _round_up(M, tm), _round_up(K, 128), _round_up(Dout, 128)
    # One-time trace-level transpose of the weight (avoids a per-tile
    # in-kernel relayout); lane-dense (Dp multiple of 128) output stores.
    wt = _pad2(jnp.transpose(w).astype(jnp.bfloat16), Kp, Dp)
    bp = _pad2(b.reshape(1, Dout).astype(jnp.float32), 1, Dp)
    x_spec = pl.BlockSpec((tm, Kp), lambda i: (i, 0))
    w_spec = pl.BlockSpec((Kp, Dp), lambda i: (0, 0))
    b_spec = pl.BlockSpec((1, Dp), lambda i: (0, 0))
    o_spec = pl.BlockSpec((tm, Dp), lambda i: (i, 0))
    if prompt_feat is None:
        kern = _linear_kernel
        args = (_pad2(x.astype(jnp.bfloat16), Mp, Kp), wt, bp)
        in_specs = [x_spec, w_spec, b_spec]
    else:
        kern = functools.partial(_linear_prompt_kernel, scale=prompt_scale)
        args = (_pad2(x.astype(jnp.bfloat16), Mp, Kp),
                _pad2(prompt_feat.astype(jnp.bfloat16), Mp, Kp), wt, bp)
        in_specs = [x_spec, x_spec, w_spec, b_spec]
    out = pl.pallas_call(
        kern,
        out_shape=jax.ShapeDtypeStruct((Mp, Dp), jnp.float32),
        grid=(Mp // tm,),
        in_specs=in_specs,
        out_specs=o_spec,
        compiler_params=pltpu.CompilerParams(
            dimension_semantics=("parallel",),
            vmem_limit_bytes=_VMEM_LIMIT),
    )(*args)
    return out[:M, :Dout]


def _combine_kernel(base_ref, x1_ref, x2_ref, o_ref, *, scale, inv_denom):
    # o = base/denom + scale*normalize(x1, dim=1) + scale*normalize(x2, dim=1)
    x1 = x1_ref[...]
    x2 = x2_ref[...]
    inv1 = lax.rsqrt(jnp.maximum(jnp.sum(x1 * x1, axis=1, keepdims=True),
                                 EPS * EPS))
    inv2 = lax.rsqrt(jnp.maximum(jnp.sum(x2 * x2, axis=1, keepdims=True),
                                 EPS * EPS))
    o_ref[...] = (base_ref[...] * inv_denom
                  + scale * (x1 * inv1) + scale * (x2 * inv2))


def pl_combine(base_sum, x1, x2, *, scale, denom):
    """Fused layer-mean (divide) + two scaled row-normalized adds."""
    M, D = base_sum.shape
    tm = min(_TM_ELT, _round_up(M, 8))
    Mp = _round_up(M, tm)
    args = [_pad2(v.astype(jnp.float32), Mp, D) for v in (base_sum, x1, x2)]
    spec = pl.BlockSpec((tm, D), lambda i: (i, 0))
    out = pl.pallas_call(
        functools.partial(_combine_kernel, scale=scale, inv_denom=1.0 / denom),
        out_shape=jax.ShapeDtypeStruct((Mp, D), jnp.float32),
        grid=(Mp // tm,),
        in_specs=[spec, spec, spec],
        out_specs=spec,
        compiler_params=pltpu.CompilerParams(
            dimension_semantics=("parallel",),
            vmem_limit_bytes=_VMEM_LIMIT),
    )(*args)
    return out[:M]


def _add_rownorm_kernel(base_ref, x_ref, o_ref, *, scale):
    x = x_ref[...]
    inv = lax.rsqrt(jnp.maximum(jnp.sum(x * x, axis=1, keepdims=True),
                                EPS * EPS))
    o_ref[...] = base_ref[...] + scale * (x * inv)


def pl_add_scaled_rownorm(base, x, scale):
    """base + scale * F.normalize(x, p=2, dim=1)  (prompt path only)."""
    M, D = base.shape
    tm = min(_TM_ELT, _round_up(M, 8))
    Mp = _round_up(M, tm)
    args = [_pad2(v.astype(jnp.float32), Mp, D) for v in (base, x)]
    spec = pl.BlockSpec((tm, D), lambda i: (i, 0))
    out = pl.pallas_call(
        functools.partial(_add_rownorm_kernel, scale=scale),
        out_shape=jax.ShapeDtypeStruct((Mp, D), jnp.float32),
        grid=(Mp // tm,),
        in_specs=[spec, spec],
        out_specs=spec,
        compiler_params=pltpu.CompilerParams(
            dimension_semantics=("parallel",),
            vmem_limit_bytes=_VMEM_LIMIT),
    )(*args)
    return out[:M]


# ============================== model (wrapper) ===============================

def init_params(key, n_users, n_items, embedding_dim, d_img, d_txt):
    ks = jax.random.split(key, 8)

    def xavier_normal(k, shape):
        std = float(np.sqrt(2.0 / (shape[0] + shape[1])))
        return std * jax.random.normal(k, shape, dtype=jnp.float32)

    def xavier_uniform(k, shape):
        lim = float(np.sqrt(6.0 / (shape[0] + shape[1])))
        return jax.random.uniform(k, shape, jnp.float32, -lim, lim)

    return {
        "user_emb": xavier_normal(ks[0], (n_users, embedding_dim)),
        "item_emb": xavier_normal(ks[1], (n_items, embedding_dim)),
        "image_feats": jax.random.normal(ks[2], (n_items, d_img), jnp.float32),
        "text_feats": jax.random.normal(ks[3], (n_items, d_txt), jnp.float32),
        "w_img": xavier_uniform(ks[4], (embedding_dim, d_img)),   # (out, in)
        "b_img": 0.1 * jax.random.normal(ks[5], (embedding_dim,), jnp.float32),
        "w_txt": xavier_uniform(ks[6], (embedding_dim, d_txt)),
        "b_txt": 0.1 * jax.random.normal(ks[7], (embedding_dim,), jnp.float32),
    }


def teacher_forward(params, ui_graph, iu_graph, gnn_layer, prompts=None):
    user_emb = params["user_emb"]
    item_emb = params["item_emb"]
    image_feats = params["image_feats"]
    text_feats = params["text_feats"]
    n_users, D = user_emb.shape
    n_items = item_emb.shape[0]
    d_img = image_feats.shape[1]

    gcl_loss = 0.0   # users=None call path

    # Prepare (cast->bf16 + pad) each graph operand ONCE; reused by every hop.
    ui_mm = make_graph_mm(ui_graph)
    iu_mm = make_graph_mm(iu_graph)

    if prompts is None:
        # prompt_module is None: prompts are exactly zero, so feat_prompt_* == 0
        # and F.normalize(0) == 0 -> all prompt terms vanish. Skip that compute.
        prompt_user = jnp.zeros((n_users, D), jnp.float32)
        prompt_item = jnp.zeros((n_items, D), jnp.float32)
        image_feat = pl_linear(image_feats, params["w_img"], params["b_img"])
        text_feat = pl_linear(text_feats, params["w_txt"], params["b_txt"])
        u_g = user_emb.astype(jnp.float32)
        i_g = item_emb.astype(jnp.float32)
    else:
        prompt_user, prompt_item = prompts
        pit = jnp.transpose(prompt_item)                  # small glue transpose
        # Batch image+text features so prompt_item / prompt_item.T stream once.
        feats_cat = jnp.concatenate([image_feats, text_feats], axis=1)
        fp_cat = pl_matmul(prompt_item, pl_matmul(pit, feats_cat))
        fp_img, fp_txt = fp_cat[:, :d_img], fp_cat[:, d_img:]
        image_feat = pl_linear(image_feats, params["w_img"], params["b_img"],
                               prompt_feat=fp_img,
                               prompt_scale=FEAT_SOFT_TOKEN_RATE)
        text_feat = pl_linear(text_feats, params["w_txt"], params["b_txt"],
                              prompt_feat=fp_txt,
                              prompt_scale=FEAT_SOFT_TOKEN_RATE)
        u_g = pl_add_scaled_rownorm(user_emb, prompt_user, SOFT_TOKEN_RATE)
        i_g = pl_add_scaled_rownorm(item_emb, prompt_item, SOFT_TOKEN_RATE)

    user_sum = u_g
    item_sum = i_g

    # The reference multimodal loop restarts from image_feat/text_feat every
    # iteration, so only the final pass survives -> run it once.  Batch all
    # right-hand sides sharing a graph read ([image|text|id]) so the big graph
    # operand streams from HBM once per hop (and the output is lane-dense).
    if gnn_layer >= 2:
        rhs = jnp.concatenate([image_feat, text_feat, i_g], axis=1)  # (n_items,3D)
        u_cat = ui_mm(rhs)                                           # (n_users,3D)
        i_cat = iu_mm(u_cat)                                         # (n_items,3D)
        image_user_feats, text_user_feats, u_g = (
            u_cat[:, :D], u_cat[:, D:2 * D], u_cat[:, 2 * D:])
        image_item_feats, text_item_feats, i_g = (
            i_cat[:, :D], i_cat[:, D:2 * D], i_cat[:, 2 * D:])
        user_sum = user_sum + u_g
        item_sum = item_sum + i_g
        for _ in range(1, gnn_layer - 1):       # middle (non-softmax) id hops
            u_g = ui_mm(i_g)
            i_g = iu_mm(u_g)
            user_sum = user_sum + u_g
            item_sum = item_sum + i_g
    else:
        rhs = jnp.concatenate([image_feat, text_feat], axis=1)
        u_cat = ui_mm(rhs)
        i_cat = iu_mm(u_cat)
        image_user_feats, text_user_feats = u_cat[:, :D], u_cat[:, D:]
        image_item_feats, text_item_feats = i_cat[:, :D], i_cat[:, D:]

    # Final id hop with fused row-softmax (bf16 MXU operands, f32 accumulate).
    u_g = ui_mm(i_g, softmax=True)
    i_g = iu_mm(u_g, softmax=True)
    user_sum = user_sum + u_g
    item_sum = item_sum + i_g

    # Layer-mean fused into the final combine kernel (divide by gnn_layer + 1).
    denom = float(gnn_layer + 1)
    u_out = pl_combine(user_sum, image_user_feats, text_user_feats,
                       scale=MODEL_CAT_RATE, denom=denom)
    i_out = pl_combine(item_sum, image_item_feats, text_item_feats,
                       scale=MODEL_CAT_RATE, denom=denom)

    return (u_out, i_out, image_item_feats, text_item_feats,
            image_user_feats, text_user_feats, u_out, i_out,
            prompt_user, prompt_item, gcl_loss)


# ============================ pure-JAX reference ==============================

def _norm_rows(x):
    return x / jnp.maximum(jnp.linalg.norm(x, axis=1, keepdims=True), EPS)


def teacher_forward_ref(params, ui_graph, iu_graph, gnn_layer, prompts=None):
    n_users, D = params["user_emb"].shape
    n_items = params["item_emb"].shape[0]
    image_feats, text_feats = params["image_feats"], params["text_feats"]
    if prompts is None:
        prompt_user = jnp.zeros((n_users, D), jnp.float32)
        prompt_item = jnp.zeros((n_items, D), jnp.float32)
    else:
        prompt_user, prompt_item = prompts

    fp_img = prompt_item @ (prompt_item.T @ image_feats)
    fp_txt = prompt_item @ (prompt_item.T @ text_feats)
    image_feat = ((image_feats + FEAT_SOFT_TOKEN_RATE * _norm_rows(fp_img))
                  @ params["w_img"].T + params["b_img"])
    text_feat = ((text_feats + FEAT_SOFT_TOKEN_RATE * _norm_rows(fp_txt))
                 @ params["w_txt"].T + params["b_txt"])

    for _ in range(gnn_layer):
        iu_f = ui_graph @ image_feat
        ii_f = iu_graph @ iu_f
        tu_f = ui_graph @ text_feat
        ti_f = iu_graph @ tu_f

    u_g = params["user_emb"] + SOFT_TOKEN_RATE * _norm_rows(prompt_user)
    i_g = params["item_emb"] + SOFT_TOKEN_RATE * _norm_rows(prompt_item)
    ul, il = [u_g], [i_g]
    for i in range(gnn_layer):
        if i == gnn_layer - 1:
            u_g = jax.nn.softmax(ui_graph @ i_g, axis=-1)
            i_g = jax.nn.softmax(iu_graph @ u_g, axis=-1)
        else:
            u_g = ui_graph @ i_g
            i_g = iu_graph @ u_g
        ul.append(u_g)
        il.append(i_g)
    ue = jnp.mean(jnp.stack(ul, 0), 0)
    ie = jnp.mean(jnp.stack(il, 0), 0)
    u_out = ue + MODEL_CAT_RATE * _norm_rows(iu_f) + MODEL_CAT_RATE * _norm_rows(tu_f)
    i_out = ie + MODEL_CAT_RATE * _norm_rows(ii_f) + MODEL_CAT_RATE * _norm_rows(ti_f)
    return u_out, i_out, ii_f, ti_f, iu_f, tu_f


# =================================== main =====================================

if __name__ == "__main__":
    n_users, n_items = 16, 24
    embedding_dim = 32
    d_img, d_txt = 64, 48
    gnn_layer = 2

    key = jax.random.PRNGKey(0)
    k_params, k_ui, k_pu, k_pi = jax.random.split(key, 4)
    params = init_params(k_params, n_users, n_items, embedding_dim, d_img, d_txt)

    # dense "sparse-graph" adjacencies (non-negative, row-normalized)
    ui = jax.random.uniform(k_ui, (n_users, n_items), jnp.float32)
    ui_graph = ui / jnp.sum(ui, axis=1, keepdims=True)
    iu_graph = jnp.transpose(ui) / jnp.sum(jnp.transpose(ui), axis=1, keepdims=True)

    fwd = jax.jit(functools.partial(teacher_forward, gnn_layer=gnn_layer))

    # Path 1: prompt_module=None, users=None (the reference call path).
    outs = jax.block_until_ready(fwd(params, ui_graph, iu_graph))
    ref = teacher_forward_ref(params, ui_graph, iu_graph, gnn_layer)
    # bf16 MXU operands vs. the f32 reference -> modest tolerance.
    for got, want in zip(outs[:6], ref):
        np.testing.assert_allclose(np.asarray(got), np.asarray(want),
                                   rtol=5e-2, atol=2e-2)
    assert float(outs[10]) == 0.0      # gcl_loss with users=None

    # Path 2: with a prompt module (exercises the fused prompt kernels).
    prompts = (0.1 * jax.random.normal(k_pu, (n_users, embedding_dim), jnp.float32),
               0.1 * jax.random.normal(k_pi, (n_items, embedding_dim), jnp.float32))
    outs_p = jax.block_until_ready(fwd(params, ui_graph, iu_graph, prompts=prompts))
    ref_p = teacher_forward_ref(params, ui_graph, iu_graph, gnn_layer,
                                prompts=prompts)
    for got, want in zip(outs_p[:6], ref_p):
        np.testing.assert_allclose(np.asarray(got), np.asarray(want),
                                   rtol=5e-2, atol=2e-2)

    print("KERNEL_OK")
</pallas_src>

<mosaic_0001>
module attributes {stable_mosaic.version = 11 : i64} {
  func.func @_linear_kernel(%arg0: i32, %arg1: memref<32x128xbf16, #tpu.memory_space<vmem>>, %arg2: memref<128x128xbf16, #tpu.memory_space<vmem>>, %arg3: memref<1x128xf32, #tpu.memory_space<vmem>>, %arg4: memref<32x128xf32, #tpu.memory_space<vmem>>) attributes {dimension_semantics = [#tpu.dimension_semantics<parallel>], iteration_bounds = array<i64: 1>, scalar_prefetch = 0 : i64, scratch_operands = 0 : i64, tpu.core_type = #tpu.core_type<tc>, window_params = [{transform_indices = @transform_0, window_bounds = array<i64: 32, 128>}, {pipeline_mode = #tpu.pipeline_mode<synchronous>, transform_indices = @transform_1, window_bounds = array<i64: 128, 128>}, {pipeline_mode = #tpu.pipeline_mode<synchronous>, transform_indices = @transform_2, window_bounds = array<i64: 1, 128>}, {transform_indices = @transform_3, window_bounds = array<i64: 32, 128>}]} {
    %c0 = arith.constant 0 : index
    %c0_0 = arith.constant 0 : index
    %0 = vector.load %arg1[%c0, %c0_0] : memref<32x128xbf16, #tpu.memory_space<vmem>>, vector<32x128xbf16>
    %c0_1 = arith.constant 0 : index
    %c0_2 = arith.constant 0 : index
    %1 = vector.load %arg2[%c0_1, %c0_2] : memref<128x128xbf16, #tpu.memory_space<vmem>>, vector<128x128xbf16>
    %cst = arith.constant dense<0.000000e+00> : vector<32x128xf32>
    %2 = tpu.matmul %0, %1, %cst {dimension_numbers = #tpu.dot_dimension_numbers<[1], [0], [0], [1], [0, 0, 1, 1], [], []>} : vector<32x128xbf16>, vector<128x128xbf16>, vector<32x128xf32> -> vector<32x128xf32>
    %c0_3 = arith.constant 0 : index
    %c0_4 = arith.constant 0 : index
    %3 = vector.load %arg3[%c0_3, %c0_4] : memref<1x128xf32, #tpu.memory_space<vmem>>, vector<1x128xf32>
    %4 = vector.broadcast %3 : vector<1x128xf32> to vector<32x128xf32>
    %5 = arith.addf %2, %4 : vector<32x128xf32>
    %c0_5 = arith.constant 0 : index
    %c0_6 = arith.constant 0 : index
    %6 = vector.load %arg4[%c0_5, %c0_6] : memref<32x128xf32, #tpu.memory_space<vmem>>, vector<32x128xf32>
    tpu.vector_store %arg4[%c0_5, %c0_6], %5 {strides = array<i32>} : memref<32x128xf32, #tpu.memory_space<vmem>>, vector<32x128xf32>,
    return
  }
  func.func @transform_0(%arg0: i32) -> (i32, i32) {
    %c0_i32 = arith.constant 0 : i32
    %c0_i32_0 = arith.constant 0 : i32
    return %arg0, %c0_i32 : i32, i32
  }
  func.func @transform_1(%arg0: i32) -> (i32, i32) {
    %c0_i32 = arith.constant 0 : i32
    %c0_i32_0 = arith.constant 0 : i32
    %c0_i32_1 = arith.constant 0 : i32
    return %c0_i32, %c0_i32_0 : i32, i32
  }
  func.func @transform_2(%arg0: i32) -> (i32, i32) {
    %c0_i32 = arith.constant 0 : i32
    %c0_i32_0 = arith.constant 0 : i32
    %c0_i32_1 = arith.constant 0 : i32
    return %c0_i32, %c0_i32_0 : i32, i32
  }
  func.func @transform_3(%arg0: i32) -> (i32, i32) {
    %c0_i32 = arith.constant 0 : i32
    %c0_i32_0 = arith.constant 0 : i32
    return %arg0, %c0_i32 : i32, i32
  }
}

module attributes {stable_mosaic.version = 11 : i64} {
  func.func @_matmul_kernel(%arg0: i32, %arg1: i32, %arg2: i32, %arg3: memref<16x128xbf16, #tpu.memory_space<vmem>>, %arg4: memref<128x128xbf16, #tpu.memory_space<vmem>>, %arg5: memref<16x128xf32, #tpu.memory_space<vmem>>) attributes {dimension_semantics = [#tpu.dimension_semantics<parallel>, #tpu.dimension_semantics<parallel>, #tpu.dimension_semantics<arbitrary>], iteration_bounds = array<i64: 1, 1, 1>, scalar_prefetch = 0 : i64, scratch_operands = 0 : i64, tpu.core_type = #tpu.core_type<tc>, window_params = [{transform_indices = @transform_0, window_bounds = array<i64: 16, 128>}, {transform_indices = @transform_1, window_bounds = array<i64: 128, 128>}, {transform_indices = @transform_2, window_bounds = array<i64: 16, 128>}]} {
    %c0_i32 = arith.constant 0 : i32
    %0 = arith.cmpi eq, %arg2, %c0_i32 : i32
    %1 = arith.extui %0 : i1 to i32
    %c0_i32_0 = arith.constant 0 : i32
    %2 = arith.cmpi ne, %1, %c0_i32_0 : i32
    scf.if %2 {
      %cst_8 = arith.constant 0.000000e+00 : f32
      %9 = vector.broadcast %cst_8 : f32 to vector<16x128xf32>
      %c0_9 = arith.constant 0 : index
      %c0_10 = arith.constant 0 : index
      %10 = vector.load %arg5[%c0_9, %c0_10] : memref<16x128xf32, #tpu.memory_space<vmem>>, vector<16x128xf32>
      tpu.vector_store %arg5[%c0_9, %c0_10], %9 {strides = array<i32>} : memref<16x128xf32, #tpu.memory_space<vmem>>, vector<16x128xf32>,
    } else {
    }
    %c0 = arith.constant 0 : index
    %c0_1 = arith.constant 0 : index
    %3 = vector.load %arg5[%c0, %c0_1] : memref<16x128xf32, #tpu.memory_space<vmem>>, vector<16x128xf32>
    %c0_2 = arith.constant 0 : index
    %c0_3 = arith.constant 0 : index
    %4 = vector.load %arg3[%c0_2, %c0_3] : memref<16x128xbf16, #tpu.memory_space<vmem>>, vector<16x128xbf16>
    %c0_4 = arith.constant 0 : index
    %c0_5 = arith.constant 0 : index
    %5 = vector.load %arg4[%c0_4, %c0_5] : memref<128x128xbf16, #tpu.memory_space<vmem>>, vector<128x128xbf16>
    %cst = arith.constant dense<0.000000e+00> : vector<16x128xf32>
    %6 = tpu.matmul %4, %5, %cst {dimension_numbers = #tpu.dot_dimension_numbers<[1], [0], [0], [1], [0, 0, 1, 1], [], []>} : vector<16x128xbf16>, vector<128x128xbf16>, vector<16x128xf32> -> vector<16x128xf32>
    %7 = arith.addf %3, %6 : vector<16x128xf32>
    %c0_6 = arith.constant 0 : index
    %c0_7 = arith.constant 0 : index
    %8 = vector.load %arg5[%c0_6, %c0_7] : memref<16x128xf32, #tpu.memory_space<vmem>>, vector<16x128xf32>
    tpu.vector_store %arg5[%c0_6, %c0_7], %7 {strides = array<i32>} : memref<16x128xf32, #tpu.memory_space<vmem>>, vector<16x128xf32>,
    return
  }
  func.func @transform_0(%arg0: i32, %arg1: i32, %arg2: i32) -> (i32, i32) {
    %c0_i32 = arith.constant 0 : i32
    return %arg0, %arg2 : i32, i32
  }
  func.func @transform_1(%arg0: i32, %arg1: i32, %arg2: i32) -> (i32, i32) {
    %c0_i32 = arith.constant 0 : i32
    return %arg2, %arg1 : i32, i32
  }
  func.func @transform_2(%arg0: i32, %arg1: i32, %arg2: i32) -> (i32, i32) {
    %c0_i32 = arith.constant 0 : i32
    return %arg0, %arg1 : i32, i32
  }
}

module attributes {stable_mosaic.version = 11 : i64} {
  func.func @_matmul_kernel(%arg0: i32, %arg1: i32, %arg2: i32, %arg3: memref<32x128xbf16, #tpu.memory_space<vmem>>, %arg4: memref<128x128xbf16, #tpu.memory_space<vmem>>, %arg5: memref<32x128xf32, #tpu.memory_space<vmem>>) attributes {dimension_semantics = [#tpu.dimension_semantics<parallel>, #tpu.dimension_semantics<parallel>, #tpu.dimension_semantics<arbitrary>], iteration_bounds = array<i64: 1, 1, 1>, scalar_prefetch = 0 : i64, scratch_operands = 0 : i64, tpu.core_type = #tpu.core_type<tc>, window_params = [{transform_indices = @transform_0, window_bounds = array<i64: 32, 128>}, {transform_indices = @transform_1, window_bounds = array<i64: 128, 128>}, {transform_indices = @transform_2, window_bounds = array<i64: 32, 128>}]} {
    %c0_i32 = arith.constant 0 : i32
    %0 = arith.cmpi eq, %arg2, %c0_i32 : i32
    %1 = arith.extui %0 : i1 to i32
    %c0_i32_0 = arith.constant 0 : i32
    %2 = arith.cmpi ne, %1, %c0_i32_0 : i32
    scf.if %2 {
      %cst_8 = arith.constant 0.000000e+00 : f32
      %9 = vector.broadcast %cst_8 : f32 to vector<32x128xf32>
      %c0_9 = arith.constant 0 : index
      %c0_10 = arith.constant 0 : index
      %10 = vector.load %arg5[%c0_9, %c0_10] : memref<32x128xf32, #tpu.memory_space<vmem>>, vector<32x128xf32>
      tpu.vector_store %arg5[%c0_9, %c0_10], %9 {strides = array<i32>} : memref<32x128xf32, #tpu.memory_space<vmem>>, vector<32x128xf32>,
    } else {
    }
    %c0 = arith.constant 0 : index
    %c0_1 = arith.constant 0 : index
    %3 = vector.load %arg5[%c0, %c0_1] : memref<32x128xf32, #tpu.memory_space<vmem>>, vector<32x128xf32>
    %c0_2 = arith.constant 0 : index
    %c0_3 = arith.constant 0 : index
    %4 = vector.load %arg3[%c0_2, %c0_3] : memref<32x128xbf16, #tpu.memory_space<vmem>>, vector<32x128xbf16>
    %c0_4 = arith.constant 0 : index
    %c0_5 = arith.constant 0 : index
    %5 = vector.load %arg4[%c0_4, %c0_5] : memref<128x128xbf16, #tpu.memory_space<vmem>>, vector<128x128xbf16>
    %cst = arith.constant dense<0.000000e+00> : vector<32x128xf32>
    %6 = tpu.matmul %4, %5, %cst {dimension_numbers = #tpu.dot_dimension_numbers<[1], [0], [0], [1], [0, 0, 1, 1], [], []>} : vector<32x128xbf16>, vector<128x128xbf16>, vector<32x128xf32> -> vector<32x128xf32>
    %7 = arith.addf %3, %6 : vector<32x128xf32>
    %c0_6 = arith.constant 0 : index
    %c0_7 = arith.constant 0 : index
    %8 = vector.load %arg5[%c0_6, %c0_7] : memref<32x128xf32, #tpu.memory_space<vmem>>, vector<32x128xf32>
    tpu.vector_store %arg5[%c0_6, %c0_7], %7 {strides = array<i32>} : memref<32x128xf32, #tpu.memory_space<vmem>>, vector<32x128xf32>,
    return
  }
  func.func @transform_0(%arg0: i32, %arg1: i32, %arg2: i32) -> (i32, i32) {
    %c0_i32 = arith.constant 0 : i32
    return %arg0, %arg2 : i32, i32
  }
  func.func @transform_1(%arg0: i32, %arg1: i32, %arg2: i32) -> (i32, i32) {
    %c0_i32 = arith.constant 0 : i32
    return %arg2, %arg1 : i32, i32
  }
  func.func @transform_2(%arg0: i32, %arg1: i32, %arg2: i32) -> (i32, i32) {
    %c0_i32 = arith.constant 0 : i32
    return %arg0, %arg1 : i32, i32
  }
}

module attributes {stable_mosaic.version = 11 : i64} {
  func.func @_matmul_kernel(%arg0: i32, %arg1: i32, %arg2: i32, %arg3: memref<16x128xbf16, #tpu.memory_space<vmem>>, %arg4: memref<128x128xbf16, #tpu.memory_space<vmem>>, %arg5: memref<16x128xf32, #tpu.memory_space<vmem>>) attributes {dimension_semantics = [#tpu.dimension_semantics<parallel>, #tpu.dimension_semantics<parallel>, #tpu.dimension_semantics<arbitrary>], iteration_bounds = array<i64: 1, 1, 1>, scalar_prefetch = 0 : i64, scratch_operands = 0 : i64, tpu.core_type = #tpu.core_type<tc>, window_params = [{transform_indices = @transform_0, window_bounds = array<i64: 16, 128>}, {transform_indices = @transform_1, window_bounds = array<i64: 128, 128>}, {transform_indices = @transform_2, window_bounds = array<i64: 16, 128>}]} {
    %c0_i32 = arith.constant 0 : i32
    %0 = arith.cmpi eq, %arg2, %c0_i32 : i32
    %1 = arith.extui %0 : i1 to i32
    %c0_i32_0 = arith.constant 0 : i32
    %2 = arith.cmpi ne, %1, %c0_i32_0 : i32
    scf.if %2 {
      %cst_10 = arith.constant 0.000000e+00 : f32
      %12 = vector.broadcast %cst_10 : f32 to vector<16x128xf32>
      %c0_11 = arith.constant 0 : index
      %c0_12 = arith.constant 0 : index
      %13 = vector.load %arg5[%c0_11, %c0_12] : memref<16x128xf32, #tpu.memory_space<vmem>>, vector<16x128xf32>
      tpu.vector_store %arg5[%c0_11, %c0_12], %12 {strides = array<i32>} : memref<16x128xf32, #tpu.memory_space<vmem>>, vector<16x128xf32>,
    } else {
    }
    %c0 = arith.constant 0 : index
    %c0_1 = arith.constant 0 : index
    %3 = vector.load %arg5[%c0, %c0_1] : memref<16x128xf32, #tpu.memory_space<vmem>>, vector<16x128xf32>
    %c0_2 = arith.constant 0 : index
    %c0_3 = arith.constant 0 : index
    %4 = vector.load %arg3[%c0_2, %c0_3] : memref<16x128xbf16, #tpu.memory_space<vmem>>, vector<16x128xbf16>
    %c0_4 = arith.constant 0 : index
    %c0_5 = arith.constant 0 : index
    %5 = vector.load %arg4[%c0_4, %c0_5] : memref<128x128xbf16, #tpu.memory_space<vmem>>, vector<128x128xbf16>
    %cst = arith.constant dense<0.000000e+00> : vector<16x128xf32>
    %6 = tpu.matmul %4, %5, %cst {dimension_numbers = #tpu.dot_dimension_numbers<[1], [0], [0], [1], [0, 0, 1, 1], [], []>} : vector<16x128xbf16>, vector<128x128xbf16>, vector<16x128xf32> -> vector<16x128xf32>
    %7 = arith.addf %3, %6 : vector<16x128xf32>
    %c0_6 = arith.constant 0 : index
    %c0_7 = arith.constant 0 : index
    %8 = vector.load %arg5[%c0_6, %c0_7] : memref<16x128xf32, #tpu.memory_space<vmem>>, vector<16x128xf32>
    tpu.vector_store %arg5[%c0_6, %c0_7], %7 {strides = array<i32>} : memref<16x128xf32, #tpu.memory_space<vmem>>, vector<16x128xf32>,
    %c0_i32_8 = arith.constant 0 : i32
    %9 = arith.cmpi eq, %arg2, %c0_i32_8 : i32
    %10 = arith.extui %9 : i1 to i32
    %c0_i32_9 = arith.constant 0 : i32
    %11 = arith.cmpi ne, %10, %c0_i32_9 : i32
    scf.if %11 {
      %c0_10 = arith.constant 0 : index
      %c0_11 = arith.constant 0 : index
      %12 = vector.load %arg5[%c0_10, %c0_11] : memref<16x128xf32, #tpu.memory_space<vmem>>, vector<16x128xf32>
      %13 = tpu.iota {dimensions = array<i32: 1>} : vector<16x128xi32>
      %c32_i32 = arith.constant 32 : i32
      %14 = vector.broadcast %c32_i32 : i32 to vector<16x128xi32>
      %15 = arith.cmpi slt, %13, %14 : vector<16x128xi32>
      %cst_12 = arith.constant 0xFF800000 : f32
      %16 = vector.broadcast %cst_12 : f32 to vector<16x128xf32>
      %17 = arith.select %15, %12, %16 : vector<16x128xi1>, vector<16x128xf32>
      %cst_13 = arith.constant dense<0xFF800000> : vector<16xf32>
      %18 = vector.multi_reduction <maximumf>, %17, %cst_13 [1] : vector<16x128xf32> to vector<16xf32>
      %19 = vector.shape_cast %18 : vector<16xf32> to vector<16x1xf32>
      %20 = vector.broadcast %19 : vector<16x1xf32> to vector<16x128xf32>
      %21 = arith.subf %17, %20 : vector<16x128xf32>
      %22 = math.exp %21 : vector<16x128xf32>
      %cst_14 = arith.constant dense<0.000000e+00> : vector<16xf32>
      %23 = vector.multi_reduction <add>, %22, %cst_14 [1] : vector<16x128xf32> to vector<16xf32>
      %24 = vector.shape_cast %23 : vector<16xf32> to vector<16x1xf32>
      %25 = vector.broadcast %24 : vector<16x1xf32> to vector<16x128xf32>
      %26 = arith.divf %22, %25 : vector<16x128xf32>
      %c0_15 = arith.constant 0 : index
      %c0_16 = arith.constant 0 : index
      %27 = vector.load %arg5[%c0_15, %c0_16] : memref<16x128xf32, #tpu.memory_space<vmem>>, vector<16x128xf32>
      tpu.vector_store %arg5[%c0_15, %c0_16], %26 {strides = array<i32>} : memref<16x128xf32, #tpu.memory_space<vmem>>, vector<16x128xf32>,
    } else {
    }
    return
  }
  func.func @transform_0(%arg0: i32, %arg1: i32, %arg2: i32) -> (i32, i32) {
    %c0_i32 = arith.constant 0 : i32
    return %arg0, %arg2 : i32, i32
  }
  func.func @transform_1(%arg0: i32, %arg1: i32, %arg2: i32) -> (i32, i32) {
    %c0_i32 = arith.constant 0 : i32
    return %arg2, %arg1 : i32, i32
  }
  func.func @transform_2(%arg0: i32, %arg1: i32, %arg2: i32) -> (i32, i32) {
    %c0_i32 = arith.constant 0 : i32
    return %arg0, %arg1 : i32, i32
  }
}

module attributes {stable_mosaic.version = 11 : i64} {
  func.func @_matmul_kernel(%arg0: i32, %arg1: i32, %arg2: i32, %arg3: memref<32x128xbf16, #tpu.memory_space<vmem>>, %arg4: memref<128x128xbf16, #tpu.memory_space<vmem>>, %arg5: memref<32x128xf32, #tpu.memory_space<vmem>>) attributes {dimension_semantics = [#tpu.dimension_semantics<parallel>, #tpu.dimension_semantics<parallel>, #tpu.dimension_semantics<arbitrary>], iteration_bounds = array<i64: 1, 1, 1>, scalar_prefetch = 0 : i64, scratch_operands = 0 : i64, tpu.core_type = #tpu.core_type<tc>, window_params = [{transform_indices = @transform_0, window_bounds = array<i64: 32, 128>}, {transform_indices = @transform_1, window_bounds = array<i64: 128, 128>}, {transform_indices = @transform_2, window_bounds = array<i64: 32, 128>}]} {
    %c0_i32 = arith.constant 0 : i32
    %0 = arith.cmpi eq, %arg2, %c0_i32 : i32
    %1 = arith.extui %0 : i1 to i32
    %c0_i32_0 = arith.constant 0 : i32
    %2 = arith.cmpi ne, %1, %c0_i32_0 : i32
    scf.if %2 {
      %cst_10 = arith.constant 0.000000e+00 : f32
      %12 = vector.broadcast %cst_10 : f32 to vector<32x128xf32>
      %c0_11 = arith.constant 0 : index
      %c0_12 = arith.constant 0 : index
      %13 = vector.load %arg5[%c0_11, %c0_12] : memref<32x128xf32, #tpu.memory_space<vmem>>, vector<32x128xf32>
      tpu.vector_store %arg5[%c0_11, %c0_12], %12 {strides = array<i32>} : memref<32x128xf32, #tpu.memory_space<vmem>>, vector<32x128xf32>,
    } else {
    }
    %c0 = arith.constant 0 : index
    %c0_1 = arith.constant 0 : index
    %3 = vector.load %arg5[%c0, %c0_1] : memref<32x128xf32, #tpu.memory_space<vmem>>, vector<32x128xf32>
    %c0_2 = arith.constant 0 : index
    %c0_3 = arith.constant 0 : index
    %4 = vector.load %arg3[%c0_2, %c0_3] : memref<32x128xbf16, #tpu.memory_space<vmem>>, vector<32x128xbf16>
    %c0_4 = arith.constant 0 : index
    %c0_5 = arith.constant 0 : index
    %5 = vector.load %arg4[%c0_4, %c0_5] : memref<128x128xbf16, #tpu.memory_space<vmem>>, vector<128x128xbf16>
    %cst = arith.constant dense<0.000000e+00> : vector<32x128xf32>
    %6 = tpu.matmul %4, %5, %cst {dimension_numbers = #tpu.dot_dimension_numbers<[1], [0], [0], [1], [0, 0, 1, 1], [], []>} : vector<32x128xbf16>, vector<128x128xbf16>, vector<32x128xf32> -> vector<32x128xf32>
    %7 = arith.addf %3, %6 : vector<32x128xf32>
    %c0_6 = arith.constant 0 : index
    %c0_7 = arith.constant 0 : index
    %8 = vector.load %arg5[%c0_6, %c0_7] : memref<32x128xf32, #tpu.memory_space<vmem>>, vector<32x128xf32>
    tpu.vector_store %arg5[%c0_6, %c0_7], %7 {strides = array<i32>} : memref<32x128xf32, #tpu.memory_space<vmem>>, vector<32x128xf32>,
    %c0_i32_8 = arith.constant 0 : i32
    %9 = arith.cmpi eq, %arg2, %c0_i32_8 : i32
    %10 = arith.extui %9 : i1 to i32
    %c0_i32_9 = arith.constant 0 : i32
    %11 = arith.cmpi ne, %10, %c0_i32_9 : i32
    scf.if %11 {
      %c0_10 = arith.constant 0 : index
      %c0_11 = arith.constant 0 : index
      %12 = vector.load %arg5[%c0_10, %c0_11] : memref<32x128xf32, #tpu.memory_space<vmem>>, vector<32x128xf32>
      %13 = tpu.iota {dimensions = array<i32: 1>} : vector<32x128xi32>
      %c32_i32 = arith.constant 32 : i32
      %14 = vector.broadcast %c32_i32 : i32 to vector<32x128xi32>
      %15 = arith.cmpi slt, %13, %14 : vector<32x128xi32>
      %cst_12 = arith.constant 0xFF800000 : f32
      %16 = vector.broadcast %cst_12 : f32 to vector<32x128xf32>
      %17 = arith.select %15, %12, %16 : vector<32x128xi1>, vector<32x128xf32>
      %cst_13 = arith.constant dense<0xFF800000> : vector<32xf32>
      %18 = vector.multi_reduction <maximumf>, %17, %cst_13 [1] : vector<32x128xf32> to vector<32xf32>
      %19 = vector.shape_cast %18 : vector<32xf32> to vector<32x1xf32>
      %20 = vector.broadcast %19 : vector<32x1xf32> to vector<32x128xf32>
      %21 = arith.subf %17, %20 : vector<32x128xf32>
      %22 = math.exp %21 : vector<32x128xf32>
      %cst_14 = arith.constant dense<0.000000e+00> : vector<32xf32>
      %23 = vector.multi_reduction <add>, %22, %cst_14 [1] : vector<32x128xf32> to vector<32xf32>
      %24 = vector.shape_cast %23 : vector<32xf32> to vector<32x1xf32>
      %25 = vector.broadcast %24 : vector<32x1xf32> to vector<32x128xf32>
      %26 = arith.divf %22, %25 : vector<32x128xf32>
      %c0_15 = arith.constant 0 : index
      %c0_16 = arith.constant 0 : index
      %27 = vector.load %arg5[%c0_15, %c0_16] : memref<32x128xf32, #tpu.memory_space<vmem>>, vector<32x128xf32>
      tpu.vector_store %arg5[%c0_15, %c0_16], %26 {strides = array<i32>} : memref<32x128xf32, #tpu.memory_space<vmem>>, vector<32x128xf32>,
    } else {
    }
    return
  }
  func.func @transform_0(%arg0: i32, %arg1: i32, %arg2: i32) -> (i32, i32) {
    %c0_i32 = arith.constant 0 : i32
    return %arg0, %arg2 : i32, i32
  }
  func.func @transform_1(%arg0: i32, %arg1: i32, %arg2: i32) -> (i32, i32) {
    %c0_i32 = arith.constant 0 : i32
    return %arg2, %arg1 : i32, i32
  }
  func.func @transform_2(%arg0: i32, %arg1: i32, %arg2: i32) -> (i32, i32) {
    %c0_i32 = arith.constant 0 : i32
    return %arg0, %arg1 : i32, i32
  }
}

module attributes {stable_mosaic.version = 11 : i64} {
  func.func @_combine_kernel(%arg0: i32, %arg1: memref<24x32xf32, #tpu.memory_space<vmem>>, %arg2: memref<24x32xf32, #tpu.memory_space<vmem>>, %arg3: memref<24x32xf32, #tpu.memory_space<vmem>>, %arg4: memref<24x32xf32, #tpu.memory_space<vmem>>) attributes {dimension_semantics = [#tpu.dimension_semantics<parallel>], iteration_bounds = array<i64: 1>, scalar_prefetch = 0 : i64, scratch_operands = 0 : i64, tpu.core_type = #tpu.core_type<tc>, window_params = [{transform_indices = @transform_0, window_bounds = array<i64: 24, 32>}, {transform_indices = @transform_1, window_bounds = array<i64: 24, 32>}, {transform_indices = @transform_2, window_bounds = array<i64: 24, 32>}, {transform_indices = @transform_3, window_bounds = array<i64: 24, 32>}]} {
    %c0 = arith.constant 0 : index
    %c0_0 = arith.constant 0 : index
    %0 = vector.load %arg2[%c0, %c0_0] : memref<24x32xf32, #tpu.memory_space<vmem>>, vector<24x32xf32>
    %c0_1 = arith.constant 0 : index
    %c0_2 = arith.constant 0 : index
    %1 = vector.load %arg3[%c0_1, %c0_2] : memref<24x32xf32, #tpu.memory_space<vmem>>, vector<24x32xf32>
    %2 = arith.mulf %0, %0 : vector<24x32xf32>
    %cst = arith.constant dense<0.000000e+00> : vector<24xf32>
    %3 = vector.multi_reduction <add>, %2, %cst [1] : vector<24x32xf32> to vector<24xf32>
    %4 = vector.shape_cast %3 : vector<24xf32> to vector<24x1xf32>
    %cst_3 = arith.constant 1.000000e-24 : f32
    %5 = vector.broadcast %cst_3 : f32 to vector<24x1xf32>
    %6 = arith.maximumf %4, %5 : vector<24x1xf32>
    %7 = math.rsqrt %6 : vector<24x1xf32>
    %8 = arith.mulf %1, %1 : vector<24x32xf32>
    %cst_4 = arith.constant dense<0.000000e+00> : vector<24xf32>
    %9 = vector.multi_reduction <add>, %8, %cst_4 [1] : vector<24x32xf32> to vector<24xf32>
    %10 = vector.shape_cast %9 : vector<24xf32> to vector<24x1xf32>
    %cst_5 = arith.constant 1.000000e-24 : f32
    %11 = vector.broadcast %cst_5 : f32 to vector<24x1xf32>
    %12 = arith.maximumf %10, %11 : vector<24x1xf32>
    %13 = math.rsqrt %12 : vector<24x1xf32>
    %c0_6 = arith.constant 0 : index
    %c0_7 = arith.constant 0 : index
    %14 = vector.load %arg1[%c0_6, %c0_7] : memref<24x32xf32, #tpu.memory_space<vmem>>, vector<24x32xf32>
    %cst_8 = arith.constant 0.333333343 : f32
    %15 = vector.broadcast %cst_8 : f32 to vector<24x32xf32>
    %16 = arith.mulf %14, %15 : vector<24x32xf32>
    %17 = vector.broadcast %7 : vector<24x1xf32> to vector<24x32xf32>
    %18 = arith.mulf %0, %17 : vector<24x32xf32>
    %cst_9 = arith.constant 5.500000e-01 : f32
    %19 = vector.broadcast %cst_9 : f32 to vector<24x32xf32>
    %20 = arith.mulf %19, %18 : vector<24x32xf32>
    %21 = arith.addf %16, %20 : vector<24x32xf32>
    %22 = vector.broadcast %13 : vector<24x1xf32> to vector<24x32xf32>
    %23 = arith.mulf %1, %22 : vector<24x32xf32>
    %cst_10 = arith.constant 5.500000e-01 : f32
    %24 = vector.broadcast %cst_10 : f32 to vector<24x32xf32>
    %25 = arith.mulf %24, %23 : vector<24x32xf32>
    %26 = arith.addf %21, %25 : vector<24x32xf32>
    %c0_11 = arith.constant 0 : index
    %c0_12 = arith.constant 0 : index
    %27 = vector.load %arg4[%c0_11, %c0_12] : memref<24x32xf32, #tpu.memory_space<vmem>>, vector<24x32xf32>
    tpu.vector_store %arg4[%c0_11, %c0_12], %26 {strides = array<i32>} : memref<24x32xf32, #tpu.memory_space<vmem>>, vector<24x32xf32>,
    return
  }
  func.func @transform_0(%arg0: i32) -> (i32, i32) {
    %c0_i32 = arith.constant 0 : i32
    %c0_i32_0 = arith.constant 0 : i32
    return %arg0, %c0_i32 : i32, i32
  }
  func.func @transform_1(%arg0: i32) -> (i32, i32) {
    %c0_i32 = arith.constant 0 : i32
    %c0_i32_0 = arith.constant 0 : i32
    return %arg0, %c0_i32 : i32, i32
  }
  func.func @transform_2(%arg0: i32) -> (i32, i32) {
    %c0_i32 = arith.constant 0 : i32
    %c0_i32_0 = arith.constant 0 : i32
    return %arg0, %c0_i32 : i32, i32
  }
  func.func @transform_3(%arg0: i32) -> (i32, i32) {
    %c0_i32 = arith.constant 0 : i32
    %c0_i32_0 = arith.constant 0 : i32
    return %arg0, %c0_i32 : i32, i32
  }
}

module attributes {stable_mosaic.version = 11 : i64} {
  func.func @_combine_kernel(%arg0: i32, %arg1: memref<16x32xf32, #tpu.memory_space<vmem>>, %arg2: memref<16x32xf32, #tpu.memory_space<vmem>>, %arg3: memref<16x32xf32, #tpu.memory_space<vmem>>, %arg4: memref<16x32xf32, #tpu.memory_space<vmem>>) attributes {dimension_semantics = [#tpu.dimension_semantics<parallel>], iteration_bounds = array<i64: 1>, scalar_prefetch = 0 : i64, scratch_operands = 0 : i64, tpu.core_type = #tpu.core_type<tc>, window_params = [{transform_indices = @transform_0, window_bounds = array<i64: 16, 32>}, {transform_indices = @transform_1, window_bounds = array<i64: 16, 32>}, {transform_indices = @transform_2, window_bounds = array<i64: 16, 32>}, {transform_indices = @transform_3, window_bounds = array<i64: 16, 32>}]} {
    %c0 = arith.constant 0 : index
    %c0_0 = arith.constant 0 : index
    %0 = vector.load %arg2[%c0, %c0_0] : memref<16x32xf32, #tpu.memory_space<vmem>>, vector<16x32xf32>
    %c0_1 = arith.constant 0 : index
    %c0_2 = arith.constant 0 : index
    %1 = vector.load %arg3[%c0_1, %c0_2] : memref<16x32xf32, #tpu.memory_space<vmem>>, vector<16x32xf32>
    %2 = arith.mulf %0, %0 : vector<16x32xf32>
    %cst = arith.constant dense<0.000000e+00> : vector<16xf32>
    %3 = vector.multi_reduction <add>, %2, %cst [1] : vector<16x32xf32> to vector<16xf32>
    %4 = vector.shape_cast %3 : vector<16xf32> to vector<16x1xf32>
    %cst_3 = arith.constant 1.000000e-24 : f32
    %5 = vector.broadcast %cst_3 : f32 to vector<16x1xf32>
    %6 = arith.maximumf %4, %5 : vector<16x1xf32>
    %7 = math.rsqrt %6 : vector<16x1xf32>
    %8 = arith.mulf %1, %1 : vector<16x32xf32>
    %cst_4 = arith.constant dense<0.000000e+00> : vector<16xf32>
    %9 = vector.multi_reduction <add>, %8, %cst_4 [1] : vector<16x32xf32> to vector<16xf32>
    %10 = vector.shape_cast %9 : vector<16xf32> to vector<16x1xf32>
    %cst_5 = arith.constant 1.000000e-24 : f32
    %11 = vector.broadcast %cst_5 : f32 to vector<16x1xf32>
    %12 = arith.maximumf %10, %11 : vector<16x1xf32>
    %13 = math.rsqrt %12 : vector<16x1xf32>
    %c0_6 = arith.constant 0 : index
    %c0_7 = arith.constant 0 : index
    %14 = vector.load %arg1[%c0_6, %c0_7] : memref<16x32xf32, #tpu.memory_space<vmem>>, vector<16x32xf32>
    %cst_8 = arith.constant 0.333333343 : f32
    %15 = vector.broadcast %cst_8 : f32 to vector<16x32xf32>
    %16 = arith.mulf %14, %15 : vector<16x32xf32>
    %17 = vector.broadcast %7 : vector<16x1xf32> to vector<16x32xf32>
    %18 = arith.mulf %0, %17 : vector<16x32xf32>
    %cst_9 = arith.constant 5.500000e-01 : f32
    %19 = vector.broadcast %cst_9 : f32 to vector<16x32xf32>
    %20 = arith.mulf %19, %18 : vector<16x32xf32>
    %21 = arith.addf %16, %20 : vector<16x32xf32>
    %22 = vector.broadcast %13 : vector<16x1xf32> to vector<16x32xf32>
    %23 = arith.mulf %1, %22 : vector<16x32xf32>
    %cst_10 = arith.constant 5.500000e-01 : f32
    %24 = vector.broadcast %cst_10 : f32 to vector<16x32xf32>
    %25 = arith.mulf %24, %23 : vector<16x32xf32>
    %26 = arith.addf %21, %25 : vector<16x32xf32>
    %c0_11 = arith.constant 0 : index
    %c0_12 = arith.constant 0 : index
    %27 = vector.load %arg4[%c0_11, %c0_12] : memref<16x32xf32, #tpu.memory_space<vmem>>, vector<16x32xf32>
    tpu.vector_store %arg4[%c0_11, %c0_12], %26 {strides = array<i32>} : memref<16x32xf32, #tpu.memory_space<vmem>>, vector<16x32xf32>,
    return
  }
  func.func @transform_0(%arg0: i32) -> (i32, i32) {
    %c0_i32 = arith.constant 0 : i32
    %c0_i32_0 = arith.constant 0 : i32
    return %arg0, %c0_i32 : i32, i32
  }
  func.func @transform_1(%arg0: i32) -> (i32, i32) {
    %c0_i32 = arith.constant 0 : i32
    %c0_i32_0 = arith.constant 0 : i32
    return %arg0, %c0_i32 : i32, i32
  }
  func.func @transform_2(%arg0: i32) -> (i32, i32) {
    %c0_i32 = arith.constant 0 : i32
    %c0_i32_0 = arith.constant 0 : i32
    return %arg0, %c0_i32 : i32, i32
  }
  func.func @transform_3(%arg0: i32) -> (i32, i32) {
    %c0_i32 = arith.constant 0 : i32
    %c0_i32_0 = arith.constant 0 : i32
    return %arg0, %c0_i32 : i32, i32
  }
}

</mosaic_0001>

<llo_original>
// kernel: teacher_forward.8
$region0: #{teacher_forward.8}
  #allocation0 [shape = 'u32[]', space=smem, size = 0x4, offset = 0x4, fixed_abs, tag = 'smem constant byte address 0x4 - core index']
  #allocation1 [shape = 'u32[144,128]{1,0:T(1,128)}', space=vmem, size = 0x12000, scoped, tag = 'internal scratch']
  %s0 = inlined_call_operand.vmem [shape: bf16[32,128], index: 0, kind: input, shape index: {}]
  %s1 = inlined_call_operand.vmem [shape: bf16[128,128], index: 1, kind: input, shape index: {}]
  %s2 = inlined_call_operand.vmem [shape: f32[1,128], index: 2, kind: input, shape index: {}]
  %s3 = inlined_call_operand.vmem [shape: f32[32,128], index: 3, kind: output, shape index: {}]
  %s4 = sld [smem:[#allocation0]]
  $region22: #{teacher_forward.8} parent=0
    _
  %s6 = ssub.s32 1, %s4
  %s7 = scalar_select 0, %s6, %s4
  // Predicated region
  $region2: #{teacher_forward.8} parent=0 // pred_check
    _
  $region3: #{teacher_forward.8} parent=0 // pred_check_branch
    %9 = sbr.rel (0) target = $region5
  $region4: #{teacher_forward.8} parent=0 // pred_region
    _
  $region5: #{teacher_forward.8} parent=0 // pred_fallthru
    _
  // Predicated region
  $region6: #{teacher_forward.8} parent=0 // pred_check
    _
  $region7: #{teacher_forward.8} parent=0 // pred_check_branch
    %11 = sbr.rel (0) target = $region9
  $region8: #{teacher_forward.8} parent=0 // pred_region
    _
  $region9: #{teacher_forward.8} parent=0 // pred_fallthru
    _
  // Predicated region
  $region10: #{teacher_forward.8} parent=0 // pred_check
    _
  $region11: #{teacher_forward.8} parent=0 // pred_check_branch
    %13 = sbr.rel (0) target = $region13
  $region12: #{teacher_forward.8} parent=0 // pred_region
    _
  $region13: #{teacher_forward.8} parent=0 // pred_fallthru
    _
  %v15 = vld [vmem:[%s0] sm:$0xf]
  %v16 = vld [vmem:[%s0 + $0x4] sm:$0xf]
  %v17 = vld [vmem:[%s0 + $0x8] sm:$0xf]
  %v18 = vld [vmem:[%s0 + $0xc] sm:$0xf]
  %v19 = vld [vmem:[%s1] sm:$0xf]
  %v20 = vld [vmem:[%s1 + $0x4] sm:$0xf]
  %v21 = vld [vmem:[%s1 + $0x8] sm:$0xf]
  %v22 = vld [vmem:[%s1 + $0xc] sm:$0xf]
  %v23 = vld [vmem:[%s1 + $0x10] sm:$0xf]
  %v24 = vld [vmem:[%s1 + $0x14] sm:$0xf]
  %v25 = vld [vmem:[%s1 + $0x18] sm:$0xf]
  %v26 = vld [vmem:[%s1 + $0x1c] sm:$0xf]
  %v27 = vld [vmem:[%s1 + $0x20] sm:$0xf]
  %v28 = vld [vmem:[%s1 + $0x24] sm:$0xf]
  %v29 = vld [vmem:[%s1 + $0x28] sm:$0xf]
  %v30 = vld [vmem:[%s1 + $0x2c] sm:$0xf]
  %v31 = vld [vmem:[%s1 + $0x30] sm:$0xf]
  %v32 = vld [vmem:[%s1 + $0x34] sm:$0xf]
  %v33 = vld [vmem:[%s1 + $0x38] sm:$0xf]
  %v34 = vld [vmem:[%s1 + $0x3c] sm:$0xf]
  %v35 = vld [vmem:[%s2] sm:$0x1]
  %v37 = vlaneseq
  %v38 = vshrl.u32 %v37, 7
  %v39 = vsub.s32 0, %v38
  %v40 = vrot.slane %v35, %v39
  %v46 = vunpack.c.l.b16 %v15
  %v47 = vunpack.c.l.b16 %v16
  %v48 = vunpack.c.l.b16 %v17
  %v49 = vunpack.c.l.b16 %v18
  %v50 = vpack.c.b16 %v47, %v46
  %v51 = vpack.c.b16 %v49, %v48
  %v70 = vunpack.c.l.b16 %v19
  %v71 = vunpack.c.l.b16 %v20
  %v72 = vunpack.c.l.b16 %v21
  %v73 = vunpack.c.l.b16 %v22
  %v74 = vunpack.c.l.b16 %v23
  %v75 = vunpack.c.l.b16 %v24
  %v76 = vunpack.c.l.b16 %v25
  %v77 = vunpack.c.l.b16 %v26
  %v78 = vunpack.c.l.b16 %v27
  %v79 = vunpack.c.l.b16 %v28
  %v80 = vunpack.c.l.b16 %v29
  %v81 = vunpack.c.l.b16 %v30
  %v82 = vunpack.c.l.b16 %v31
  %v83 = vunpack.c.l.b16 %v32
  %v84 = vunpack.c.l.b16 %v33
  %v85 = vunpack.c.l.b16 %v34
  %v86 = vpack.c.b16 %v71, %v70
  %v87 = vpack.c.b16 %v73, %v72
  %v88 = vpack.c.b16 %v75, %v74
  %v89 = vpack.c.b16 %v77, %v76
  %v90 = vpack.c.b16 %v79, %v78
  %v91 = vpack.c.b16 %v81, %v80
  %v92 = vpack.c.b16 %v83, %v82
  %v93 = vpack.c.b16 %v85, %v84
  %102 = vmatprep.subr.bf16.mxu0 0
  %103 = vmatpush1.bf16.msra.mxu0 %v86
  %104 = vmatprep.subr.bf16.mxu0 0
  %105 = vmatpush1.bf16.msra.mxu0 %v87
  %106 = vmatprep.subr.bf16.mxu0 0
  %107 = vmatpush1.bf16.msra.mxu0 %v88
  %108 = vmatprep.subr.bf16.mxu0 0
  %109 = vmatpush1.bf16.msra.mxu0 %v89
  %110 = vmatprep.subr.bf16.mxu0 0
  %111 = vmatpush1.bf16.msra.mxu0 %v90
  %112 = vmatprep.subr.bf16.mxu0 0
  %113 = vmatpush1.bf16.msra.mxu0 %v91
  %114 = vmatprep.subr.bf16.mxu0 0
  %115 = vmatpush1.bf16.msra.mxu0 %v92
  %116 = vmatprep.subr.bf16.mxu0 0
  %117 = vmatpush1.bf16.msra.mxu0 %v93
  %118 = vmatprep.subr.bf16.mxu0 0
  %119 = vmatpush1.bf16.msra.mxu0 0
  %120 = vmatprep.subr.bf16.mxu0 0
  %121 = vmatpush1.bf16.msra.mxu0 0
  %122 = vmatprep.subr.bf16.mxu0 0
  %123 = vmatpush1.bf16.msra.mxu0 0
  %124 = vmatprep.subr.bf16.mxu0 0
  %125 = vmatpush1.bf16.msra.mxu0 0
  %126 = vmatprep.subr.bf16.mxu0 0
  %127 = vmatpush1.bf16.msra.mxu0 0
  %128 = vmatprep.subr.bf16.mxu0 0
  %129 = vmatpush1.bf16.msra.mxu0 0
  %130 = vmatprep.subr.bf16.mxu0 0
  %131 = vmatpush1.bf16.msra.mxu0 0
  %132 = vmatprep.subr.bf16.mxu0 0
  %133 = vmatpush1.bf16.msra.mxu0 0
  %134 = vmatprep.mubr.bf16.mxu0 0
  %135 = vmatmul.mubr.bf16.gmra.mrb[0].mxu0 %v50
  %v136 = vpop.f32.mrb[0].mxu0
  %v137 = vadd.f32 %v40, %v136
  %v138 = vpop.f32.mrb[0].mxu0
  %v139 = vpop.f32.mrb[0].mxu0
  %v140 = vadd.f32 %v40, %v139
  %v141 = vpop.f32.mrb[0].mxu0
  %142 = vmatprep.mubr.bf16.mxu0 0
  %143 = vmatmul.mubr.bf16.gmra.mrb[0].mxu0 %v51
  %v144 = vpop.f32.mrb[0].mxu0
  %v145 = vadd.f32 %v40, %v144
  %v146 = vpop.f32.mrb[0].mxu0
  %v147 = vpop.f32.mrb[0].mxu0
  %v148 = vadd.f32 %v40, %v147
  %v149 = vpop.f32.mrb[0].mxu0
  %150 = vdwg.mxu0
  %151 = vst [vmem:[%s3] sm:$0xff] %v137
  %152 = vst [vmem:[%s3 + $0x8] sm:$0xff] %v140
  %153 = vst [vmem:[%s3 + $0x10] sm:$0xff] %v145
  %154 = vst [vmem:[%s3 + $0x18] sm:$0xff] %v148
  // Predicated region
  $region14: #{teacher_forward.8} parent=0 // pred_check
    _
  $region15: #{teacher_forward.8} parent=0 // pred_check_branch
    %156 = sbr.rel (0) target = $region17
  $region16: #{teacher_forward.8} parent=0 // pred_region
    _
  $region17: #{teacher_forward.8} parent=0 // pred_fallthru
    _
  // Predicated region
  $region18: #{teacher_forward.8} parent=0 // pred_check
    _
  $region19: #{teacher_forward.8} parent=0 // pred_check_branch
    %158 = sbr.rel (0) target = $region21
  $region20: #{teacher_forward.8} parent=0 // pred_region
    _
  $region21: #{teacher_forward.8} parent=0 // pred_fallthru
    _

// kernel: teacher_forward.10
$region0: #{teacher_forward.10}
  #allocation0 [shape = 'u32[]', space=smem, size = 0x4, offset = 0x4, fixed_abs, tag = 'smem constant byte address 0x4 - core index']
  #allocation1 [shape = 'u32[144,128]{1,0:T(1,128)}', space=vmem, size = 0x12000, scoped, tag = 'internal scratch']
  %s0 = inlined_call_operand.vmem [shape: bf16[16,128], index: 0, kind: input, shape index: {}]
  %s1 = inlined_call_operand.vmem [shape: bf16[128,128], index: 1, kind: input, shape index: {}]
  %s2 = inlined_call_operand.vmem [shape: f32[16,128], index: 2, kind: output, shape index: {}]
  %s3 = sld [smem:[#allocation0]]
  $region22: #{teacher_forward.10} parent=0
    _
  %s5 = ssub.s32 1, %s3
  %s6 = scalar_select 0, %s5, %s3
  // Predicated region
  $region2: #{teacher_forward.10} parent=0 // pred_check
    _
  $region3: #{teacher_forward.10} parent=0 // pred_check_branch
    %8 = sbr.rel (0) target = $region5
  $region4: #{teacher_forward.10} parent=0 // pred_region
    _
  $region5: #{teacher_forward.10} parent=0 // pred_fallthru
    _
  // Predicated region
  $region6: #{teacher_forward.10} parent=0 // pred_check
    _
  $region7: #{teacher_forward.10} parent=0 // pred_check_branch
    %10 = sbr.rel (0) target = $region9
  $region8: #{teacher_forward.10} parent=0 // pred_region
    _
  $region9: #{teacher_forward.10} parent=0 // pred_fallthru
    _
  %p12 = scmp.eq.s32.totalorder 0, 0
  // Predicated region
  $region10: #{teacher_forward.10} parent=0 // pred_check
    %p13 = pneg %p12
  $region11: #{teacher_forward.10} parent=0 // pred_check_branch
    %15 = sbr.rel (%p13) target = $region13
  $region12: #{teacher_forward.10} parent=0 // pred_region
    %16 = vst [vmem:[%s2] sm:$0xff] 0.0
    %17 = vst [vmem:[%s2 + $0x8] sm:$0xff] 0.0
  $region13: #{teacher_forward.10} parent=0 // pred_fallthru
    _
  %v18 = vld [vmem:[%s2] sm:$0xff]
  %v19 = vld [vmem:[%s2 + $0x8] sm:$0xff]
  %v20 = vld [vmem:[%s0] sm:$0xf]
  %v21 = vld [vmem:[%s0 + $0x4] sm:$0xf]
  %v22 = vld [vmem:[%s1] sm:$0xf]
  %v23 = vld [vmem:[%s1 + $0x4] sm:$0xf]
  %v24 = vld [vmem:[%s1 + $0x8] sm:$0xf]
  %v25 = vld [vmem:[%s1 + $0xc] sm:$0xf]
  %v26 = vld [vmem:[%s1 + $0x10] sm:$0xf]
  %v27 = vld [vmem:[%s1 + $0x14] sm:$0xf]
  %v28 = vld [vmem:[%s1 + $0x18] sm:$0xf]
  %v29 = vld [vmem:[%s1 + $0x1c] sm:$0xf]
  %v30 = vld [vmem:[%s1 + $0x20] sm:$0xf]
  %v31 = vld [vmem:[%s1 + $0x24] sm:$0xf]
  %v32 = vld [vmem:[%s1 + $0x28] sm:$0xf]
  %v33 = vld [vmem:[%s1 + $0x2c] sm:$0xf]
  %v34 = vld [vmem:[%s1 + $0x30] sm:$0xf]
  %v35 = vld [vmem:[%s1 + $0x34] sm:$0xf]
  %v36 = vld [vmem:[%s1 + $0x38] sm:$0xf]
  %v37 = vld [vmem:[%s1 + $0x3c] sm:$0xf]
  %v40 = vunpack.c.l.b16 %v20
  %v41 = vunpack.c.l.b16 %v21
  %v42 = vpack.c.b16 %v41, %v40
  %v60 = vunpack.c.l.b16 %v22
  %v61 = vunpack.c.l.b16 %v23
  %v62 = vunpack.c.l.b16 %v24
  %v63 = vunpack.c.l.b16 %v25
  %v64 = vunpack.c.l.b16 %v26
  %v65 = vunpack.c.l.b16 %v27
  %v66 = vunpack.c.l.b16 %v28
  %v67 = vunpack.c.l.b16 %v29
  %v68 = vunpack.c.l.b16 %v30
  %v69 = vunpack.c.l.b16 %v31
  %v70 = vunpack.c.l.b16 %v32
  %v71 = vunpack.c.l.b16 %v33
  %v72 = vunpack.c.l.b16 %v34
  %v73 = vunpack.c.l.b16 %v35
  %v74 = vunpack.c.l.b16 %v36
  %v75 = vunpack.c.l.b16 %v37
  %v76 = vpack.c.b16 %v61, %v60
  %v77 = vpack.c.b16 %v63, %v62
  %v78 = vpack.c.b16 %v65, %v64
  %v79 = vpack.c.b16 %v67, %v66
  %v80 = vpack.c.b16 %v69, %v68
  %v81 = vpack.c.b16 %v71, %v70
  %v82 = vpack.c.b16 %v73, %v72
  %v83 = vpack.c.b16 %v75, %v74
  %92 = vmatprep.subr.bf16.mxu0 0
  %93 = vmatpush1.bf16.msra.mxu0 %v76
  %94 = vmatprep.subr.bf16.mxu0 0
  %95 = vmatpush1.bf16.msra.mxu0 %v77
  %96 = vmatprep.subr.bf16.mxu0 0
  %97 = vmatpush1.bf16.msra.mxu0 %v78
  %98 = vmatprep.subr.bf16.mxu0 0
  %99 = vmatpush1.bf16.msra.mxu0 %v79
  %100 = vmatprep.subr.bf16.mxu0 0
  %101 = vmatpush1.bf16.msra.mxu0 %v80
  %102 = vmatprep.subr.bf16.mxu0 0
  %103 = vmatpush1.bf16.msra.mxu0 %v81
  %104 = vmatprep.subr.bf16.mxu0 0
  %105 = vmatpush1.bf16.msra.mxu0 %v82
  %106 = vmatprep.subr.bf16.mxu0 0
  %107 = vmatpush1.bf16.msra.mxu0 %v83
  %108 = vmatprep.subr.bf16.mxu0 0
  %109 = vmatpush1.bf16.msra.mxu0 0
  %110 = vmatprep.subr.bf16.mxu0 0
  %111 = vmatpush1.bf16.msra.mxu0 0
  %112 = vmatprep.subr.bf16.mxu0 0
  %113 = vmatpush1.bf16.msra.mxu0 0
  %114 = vmatprep.subr.bf16.mxu0 0
  %115 = vmatpush1.bf16.msra.mxu0 0
  %116 = vmatprep.subr.bf16.mxu0 0
  %117 = vmatpush1.bf16.msra.mxu0 0
  %118 = vmatprep.subr.bf16.mxu0 0
  %119 = vmatpush1.bf16.msra.mxu0 0
  %120 = vmatprep.subr.bf16.mxu0 0
  %121 = vmatpush1.bf16.msra.mxu0 0
  %122 = vmatprep.subr.bf16.mxu0 0
  %123 = vmatpush1.bf16.msra.mxu0 0
  %124 = vmatprep.mubr.bf16.mxu0 0
  %125 = vmatmul.mubr.bf16.gmra.mrb[0].mxu0 %v42
  %v126 = vpop.f32.mrb[0].mxu0
  %v127 = vadd.f32 0.0, %v126
  %v128 = vpop.f32.mrb[0].mxu0
  %v129 = vpop.f32.mrb[0].mxu0
  %v130 = vadd.f32 0.0, %v129
  %v131 = vpop.f32.mrb[0].mxu0
  %132 = vdwg.mxu0
  %v133 = vadd.f32 %v18, %v127
  %v134 = vadd.f32 %v19, %v130
  %135 = vst [vmem:[%s2] sm:$0xff] %v133
  %136 = vst [vmem:[%s2 + $0x8] sm:$0xff] %v134
  // Predicated region
  $region14: #{teacher_forward.10} parent=0 // pred_check
    _
  $region15: #{teacher_forward.10} parent=0 // pred_check_branch
    %138 = sbr.rel (0) target = $region17
  $region16: #{teacher_forward.10} parent=0 // pred_region
    _
  $region17: #{teacher_forward.10} parent=0 // pred_fallthru
    _
  // Predicated region
  $region18: #{teacher_forward.10} parent=0 // pred_check
    _
  $region19: #{teacher_forward.10} parent=0 // pred_check_branch
    %140 = sbr.rel (0) target = $region21
  $region20: #{teacher_forward.10} parent=0 // pred_region
    _
  $region21: #{teacher_forward.10} parent=0 // pred_fallthru
    _

// kernel: teacher_forward.11
$region0: #{teacher_forward.11}
  #allocation0 [shape = 'u32[]', space=smem, size = 0x4, offset = 0x4, fixed_abs, tag = 'smem constant byte address 0x4 - core index']
  #allocation1 [shape = 'u32[144,128]{1,0:T(1,128)}', space=vmem, size = 0x12000, scoped, tag = 'internal scratch']
  %s0 = inlined_call_operand.vmem [shape: bf16[32,128], index: 0, kind: input, shape index: {}]
  %s1 = inlined_call_operand.vmem [shape: bf16[128,128], index: 1, kind: input, shape index: {}]
  %s2 = inlined_call_operand.vmem [shape: f32[32,128], index: 2, kind: output, shape index: {}]
  %s3 = sld [smem:[#allocation0]]
  $region22: #{teacher_forward.11} parent=0
    _
  %s5 = ssub.s32 1, %s3
  %s6 = scalar_select 0, %s5, %s3
  // Predicated region
  $region2: #{teacher_forward.11} parent=0 // pred_check
    _
  $region3: #{teacher_forward.11} parent=0 // pred_check_branch
    %8 = sbr.rel (0) target = $region5
  $region4: #{teacher_forward.11} parent=0 // pred_region
    _
  $region5: #{teacher_forward.11} parent=0 // pred_fallthru
    _
  // Predicated region
  $region6: #{teacher_forward.11} parent=0 // pred_check
    _
  $region7: #{teacher_forward.11} parent=0 // pred_check_branch
    %10 = sbr.rel (0) target = $region9
  $region8: #{teacher_forward.11} parent=0 // pred_region
    _
  $region9: #{teacher_forward.11} parent=0 // pred_fallthru
    _
  %p12 = scmp.eq.s32.totalorder 0, 0
  // Predicated region
  $region10: #{teacher_forward.11} parent=0 // pred_check
    %p13 = pneg %p12
  $region11: #{teacher_forward.11} parent=0 // pred_check_branch
    %15 = sbr.rel (%p13) target = $region13
  $region12: #{teacher_forward.11} parent=0 // pred_region
    %16 = vst [vmem:[%s2] sm:$0xff] 0.0
    %17 = vst [vmem:[%s2 + $0x8] sm:$0xff] 0.0
    %18 = vst [vmem:[%s2 + $0x10] sm:$0xff] 0.0
    %19 = vst [vmem:[%s2 + $0x18] sm:$0xff] 0.0
  $region13: #{teacher_forward.11} parent=0 // pred_fallthru
    _
  %v20 = vld [vmem:[%s2] sm:$0xff]
  %v21 = vld [vmem:[%s2 + $0x8] sm:$0xff]
  %v22 = vld [vmem:[%s2 + $0x10] sm:$0xff]
  %v23 = vld [vmem:[%s2 + $0x18] sm:$0xff]
  %v24 = vld [vmem:[%s0] sm:$0xf]
  %v25 = vld [vmem:[%s0 + $0x4] sm:$0xf]
  %v26 = vld [vmem:[%s0 + $0x8] sm:$0xf]
  %v27 = vld [vmem:[%s0 + $0xc] sm:$0xf]
  %v28 = vld [vmem:[%s1] sm:$0xf]
  %v29 = vld [vmem:[%s1 + $0x4] sm:$0xf]
  %v30 = vld [vmem:[%s1 + $0x8] sm:$0xf]
  %v31 = vld [vmem:[%s1 + $0xc] sm:$0xf]
  %v32 = vld [vmem:[%s1 + $0x10] sm:$0xf]
  %v33 = vld [vmem:[%s1 + $0x14] sm:$0xf]
  %v34 = vld [vmem:[%s1 + $0x18] sm:$0xf]
  %v35 = vld [vmem:[%s1 + $0x1c] sm:$0xf]
  %v36 = vld [vmem:[%s1 + $0x20] sm:$0xf]
  %v37 = vld [vmem:[%s1 + $0x24] sm:$0xf]
  %v38 = vld [vmem:[%s1 + $0x28] sm:$0xf]
  %v39 = vld [vmem:[%s1 + $0x2c] sm:$0xf]
  %v40 = vld [vmem:[%s1 + $0x30] sm:$0xf]
  %v41 = vld [vmem:[%s1 + $0x34] sm:$0xf]
  %v42 = vld [vmem:[%s1 + $0x38] sm:$0xf]
  %v43 = vld [vmem:[%s1 + $0x3c] sm:$0xf]
  %v48 = vunpack.c.l.b16 %v24
  %v49 = vunpack.c.l.b16 %v25
  %v50 = vunpack.c.l.b16 %v26
  %v51 = vunpack.c.l.b16 %v27
  %v52 = vpack.c.b16 %v49, %v48
  %v53 = vpack.c.b16 %v51, %v50
  %v72 = vunpack.c.l.b16 %v28
  %v73 = vunpack.c.l.b16 %v29
  %v74 = vunpack.c.l.b16 %v30
  %v75 = vunpack.c.l.b16 %v31
  %v76 = vunpack.c.l.b16 %v32
  %v77 = vunpack.c.l.b16 %v33
  %v78 = vunpack.c.l.b16 %v34
  %v79 = vunpack.c.l.b16 %v35
  %v80 = vunpack.c.l.b16 %v36
  %v81 = vunpack.c.l.b16 %v37
  %v82 = vunpack.c.l.b16 %v38
  %v83 = vunpack.c.l.b16 %v39
  %v84 = vunpack.c.l.b16 %v40
  %v85 = vunpack.c.l.b16 %v41
  %v86 = vunpack.c.l.b16 %v42
  %v87 = vunpack.c.l.b16 %v43
  %v88 = vpack.c.b16 %v73, %v72
  %v89 = vpack.c.b16 %v75, %v74
  %v90 = vpack.c.b16 %v77, %v76
  %v91 = vpack.c.b16 %v79, %v78
  %v92 = vpack.c.b16 %v81, %v80
  %v93 = vpack.c.b16 %v83, %v82
  %v94 = vpack.c.b16 %v85, %v84
  %v95 = vpack.c.b16 %v87, %v86
  %104 = vmatprep.subr.bf16.mxu0 0
  %105 = vmatpush1.bf16.msra.mxu0 %v88
  %106 = vmatprep.subr.bf16.mxu0 0
  %107 = vmatpush1.bf16.msra.mxu0 %v89
  %108 = vmatprep.subr.bf16.mxu0 0
  %109 = vmatpush1.bf16.msra.mxu0 %v90
  %110 = vmatprep.subr.bf16.mxu0 0
  %111 = vmatpush1.bf16.msra.mxu0 %v91
  %112 = vmatprep.subr.bf16.mxu0 0
  %113 = vmatpush1.bf16.msra.mxu0 %v92
  %114 = vmatprep.subr.bf16.mxu0 0
  %115 = vmatpush1.bf16.msra.mxu0 %v93
  %116 = vmatprep.subr.bf16.mxu0 0
  %117 = vmatpush1.bf16.msra.mxu0 %v94
  %118 = vmatprep.subr.bf16.mxu0 0
  %119 = vmatpush1.bf16.msra.mxu0 %v95
  %120 = vmatprep.subr.bf16.mxu0 0
  %121 = vmatpush1.bf16.msra.mxu0 0
  %122 = vmatprep.subr.bf16.mxu0 0
  %123 = vmatpush1.bf16.msra.mxu0 0
  %124 = vmatprep.subr.bf16.mxu0 0
  %125 = vmatpush1.bf16.msra.mxu0 0
  %126 = vmatprep.subr.bf16.mxu0 0
  %127 = vmatpush1.bf16.msra.mxu0 0
  %128 = vmatprep.subr.bf16.mxu0 0
  %129 = vmatpush1.bf16.msra.mxu0 0
  %130 = vmatprep.subr.bf16.mxu0 0
  %131 = vmatpush1.bf16.msra.mxu0 0
  %132 = vmatprep.subr.bf16.mxu0 0
  %133 = vmatpush1.bf16.msra.mxu0 0
  %134 = vmatprep.subr.bf16.mxu0 0
  %135 = vmatpush1.bf16.msra.mxu0 0
  %136 = vmatprep.mubr.bf16.mxu0 0
  %137 = vmatmul.mubr.bf16.gmra.mrb[0].mxu0 %v52
  %v138 = vpop.f32.mrb[0].mxu0
  %v139 = vadd.f32 0.0, %v138
  %v140 = vpop.f32.mrb[0].mxu0
  %v141 = vpop.f32.mrb[0].mxu0
  %v142 = vadd.f32 0.0, %v141
  %v143 = vpop.f32.mrb[0].mxu0
  %144 = vmatprep.mubr.bf16.mxu0 0
  %145 = vmatmul.mubr.bf16.gmra.mrb[0].mxu0 %v53
  %v146 = vpop.f32.mrb[0].mxu0
  %v147 = vadd.f32 0.0, %v146
  %v148 = vpop.f32.mrb[0].mxu0
  %v149 = vpop.f32.mrb[0].mxu0
  %v150 = vadd.f32 0.0, %v149
  %v151 = vpop.f32.mrb[0].mxu0
  %152 = vdwg.mxu0
  %v153 = vadd.f32 %v20, %v139
  %v154 = vadd.f32 %v21, %v142
  %v155 = vadd.f32 %v22, %v147
  %v156 = vadd.f32 %v23, %v150
  %157 = vst [vmem:[%s2] sm:$0xff] %v153
  %158 = vst [vmem:[%s2 + $0x8] sm:$0xff] %v154
  %159 = vst [vmem:[%s2 + $0x10] sm:$0xff] %v155
  %160 = vst [vmem:[%s2 + $0x18] sm:$0xff] %v156
  // Predicated region
  $region14: #{teacher_forward.11} parent=0 // pred_check
    _
  $region15: #{teacher_forward.11} parent=0 // pred_check_branch
    %162 = sbr.rel (0) target = $region17
  $region16: #{teacher_forward.11} parent=0 // pred_region
    _
  $region17: #{teacher_forward.11} parent=0 // pred_fallthru
    _
  // Predicated region
  $region18: #{teacher_forward.11} parent=0 // pred_check
    _
  $region19: #{teacher_forward.11} parent=0 // pred_check_branch
    %164 = sbr.rel (0) target = $region21
  $region20: #{teacher_forward.11} parent=0 // pred_region
    _
  $region21: #{teacher_forward.11} parent=0 // pred_fallthru
    _

// kernel: teacher_forward.12
$region0: #{teacher_forward.12}
  #allocation0 [shape = 'u32[]', space=smem, size = 0x4, offset = 0x4, fixed_abs, tag = 'smem constant byte address 0x4 - core index']
  #allocation1 [shape = 'u32[144,128]{1,0:T(1,128)}', space=vmem, size = 0x12000, scoped, tag = 'internal scratch']
  %s0 = inlined_call_operand.vmem [shape: bf16[16,128], index: 0, kind: input, shape index: {}]
  %s1 = inlined_call_operand.vmem [shape: bf16[128,128], index: 1, kind: input, shape index: {}]
  %s2 = inlined_call_operand.vmem [shape: f32[16,128], index: 2, kind: output, shape index: {}]
  %s3 = sld [smem:[#allocation0]]
  $region26: #{teacher_forward.12} parent=0
    _
  %s5 = ssub.s32 1, %s3
  %s6 = scalar_select 0, %s5, %s3
  // Predicated region
  $region2: #{teacher_forward.12} parent=0 // pred_check
    _
  $region3: #{teacher_forward.12} parent=0 // pred_check_branch
    %8 = sbr.rel (0) target = $region5
  $region4: #{teacher_forward.12} parent=0 // pred_region
    _
  $region5: #{teacher_forward.12} parent=0 // pred_fallthru
    _
  // Predicated region
  $region6: #{teacher_forward.12} parent=0 // pred_check
    _
  $region7: #{teacher_forward.12} parent=0 // pred_check_branch
    %10 = sbr.rel (0) target = $region9
  $region8: #{teacher_forward.12} parent=0 // pred_region
    _
  $region9: #{teacher_forward.12} parent=0 // pred_fallthru
    _
  %p12 = scmp.eq.s32.totalorder 0, 0
  // Predicated region
  $region10: #{teacher_forward.12} parent=0 // pred_check
    %p13 = pneg %p12
  $region11: #{teacher_forward.12} parent=0 // pred_check_branch
    %15 = sbr.rel (%p13) target = $region13
  $region12: #{teacher_forward.12} parent=0 // pred_region
    %16 = vst [vmem:[%s2] sm:$0xff] 0.0
    %17 = vst [vmem:[%s2 + $0x8] sm:$0xff] 0.0
  $region13: #{teacher_forward.12} parent=0 // pred_fallthru
    _
  %v18 = vld [vmem:[%s2] sm:$0xff]
  %v19 = vld [vmem:[%s2 + $0x8] sm:$0xff]
  %v20 = vld [vmem:[%s0] sm:$0xf]
  %v21 = vld [vmem:[%s0 + $0x4] sm:$0xf]
  %v22 = vld [vmem:[%s1] sm:$0xf]
  %v23 = vld [vmem:[%s1 + $0x4] sm:$0xf]
  %v24 = vld [vmem:[%s1 + $0x8] sm:$0xf]
  %v25 = vld [vmem:[%s1 + $0xc] sm:$0xf]
  %v26 = vld [vmem:[%s1 + $0x10] sm:$0xf]
  %v27 = vld [vmem:[%s1 + $0x14] sm:$0xf]
  %v28 = vld [vmem:[%s1 + $0x18] sm:$0xf]
  %v29 = vld [vmem:[%s1 + $0x1c] sm:$0xf]
  %v30 = vld [vmem:[%s1 + $0x20] sm:$0xf]
  %v31 = vld [vmem:[%s1 + $0x24] sm:$0xf]
  %v32 = vld [vmem:[%s1 + $0x28] sm:$0xf]
  %v33 = vld [vmem:[%s1 + $0x2c] sm:$0xf]
  %v34 = vld [vmem:[%s1 + $0x30] sm:$0xf]
  %v35 = vld [vmem:[%s1 + $0x34] sm:$0xf]
  %v36 = vld [vmem:[%s1 + $0x38] sm:$0xf]
  %v37 = vld [vmem:[%s1 + $0x3c] sm:$0xf]
  %v40 = vunpack.c.l.b16 %v20
  %v41 = vunpack.c.l.b16 %v21
  %v42 = vpack.c.b16 %v41, %v40
  %v60 = vunpack.c.l.b16 %v22
  %v61 = vunpack.c.l.b16 %v23
  %v62 = vunpack.c.l.b16 %v24
  %v63 = vunpack.c.l.b16 %v25
  %v64 = vunpack.c.l.b16 %v26
  %v65 = vunpack.c.l.b16 %v27
  %v66 = vunpack.c.l.b16 %v28
  %v67 = vunpack.c.l.b16 %v29
  %v68 = vunpack.c.l.b16 %v30
  %v69 = vunpack.c.l.b16 %v31
  %v70 = vunpack.c.l.b16 %v32
  %v71 = vunpack.c.l.b16 %v33
  %v72 = vunpack.c.l.b16 %v34
  %v73 = vunpack.c.l.b16 %v35
  %v74 = vunpack.c.l.b16 %v36
  %v75 = vunpack.c.l.b16 %v37
  %v76 = vpack.c.b16 %v61, %v60
  %v77 = vpack.c.b16 %v63, %v62
  %v78 = vpack.c.b16 %v65, %v64
  %v79 = vpack.c.b16 %v67, %v66
  %v80 = vpack.c.b16 %v69, %v68
  %v81 = vpack.c.b16 %v71, %v70
  %v82 = vpack.c.b16 %v73, %v72
  %v83 = vpack.c.b16 %v75, %v74
  %92 = vmatprep.subr.bf16.mxu0 0
  %93 = vmatpush1.bf16.msra.mxu0 %v76
  %94 = vmatprep.subr.bf16.mxu0 0
  %95 = vmatpush1.bf16.msra.mxu0 %v77
  %96 = vmatprep.subr.bf16.mxu0 0
  %97 = vmatpush1.bf16.msra.mxu0 %v78
  %98 = vmatprep.subr.bf16.mxu0 0
  %99 = vmatpush1.bf16.msra.mxu0 %v79
  %100 = vmatprep.subr.bf16.mxu0 0
  %101 = vmatpush1.bf16.msra.mxu0 %v80
  %102 = vmatprep.subr.bf16.mxu0 0
  %103 = vmatpush1.bf16.msra.mxu0 %v81
  %104 = vmatprep.subr.bf16.mxu0 0
  %105 = vmatpush1.bf16.msra.mxu0 %v82
  %106 = vmatprep.subr.bf16.mxu0 0
  %107 = vmatpush1.bf16.msra.mxu0 %v83
  %108 = vmatprep.subr.bf16.mxu0 0
  %109 = vmatpush1.bf16.msra.mxu0 0
  %110 = vmatprep.subr.bf16.mxu0 0
  %111 = vmatpush1.bf16.msra.mxu0 0
  %112 = vmatprep.subr.bf16.mxu0 0
  %113 = vmatpush1.bf16.msra.mxu0 0
  %114 = vmatprep.subr.bf16.mxu0 0
  %115 = vmatpush1.bf16.msra.mxu0 0
  %116 = vmatprep.subr.bf16.mxu0 0
  %117 = vmatpush1.bf16.msra.mxu0 0
  %118 = vmatprep.subr.bf16.mxu0 0
  %119 = vmatpush1.bf16.msra.mxu0 0
  %120 = vmatprep.subr.bf16.mxu0 0
  %121 = vmatpush1.bf16.msra.mxu0 0
  %122 = vmatprep.subr.bf16.mxu0 0
  %123 = vmatpush1.bf16.msra.mxu0 0
  %124 = vmatprep.mubr.bf16.mxu0 0
  %125 = vmatmul.mubr.bf16.gmra.mrb[0].mxu0 %v42
  %v126 = vpop.f32.mrb[0].mxu0
  %v127 = vadd.f32 0.0, %v126
  %v128 = vpop.f32.mrb[0].mxu0
  %v129 = vpop.f32.mrb[0].mxu0
  %v130 = vadd.f32 0.0, %v129
  %v131 = vpop.f32.mrb[0].mxu0
  %132 = vdwg.mxu0
  %v133 = vadd.f32 %v18, %v127
  %v134 = vadd.f32 %v19, %v130
  %135 = vst [vmem:[%s2] sm:$0xff] %v133
  %136 = vst [vmem:[%s2 + $0x8] sm:$0xff] %v134
  // Predicated region
  $region14: #{teacher_forward.12} parent=0 // pred_check
    %p137 = pneg %p12
  $region15: #{teacher_forward.12} parent=0 // pred_check_branch
    %139 = sbr.rel (%p137) target = $region17
  $region16: #{teacher_forward.12} parent=0 // pred_region
    %v140 = vld [vmem:[%s2] sm:$0xff]
    %v141 = vld [vmem:[%s2 + $0x8] sm:$0xff]
    %v142 = vlaneseq
    %v143 = vand.u32 %v142, 127
    %vm144 = vcmp.lt.s32.totalorder %v143, 32
    %v145 = vsel %vm144, %v140, -inf
    %v146 = vsel %vm144, %v141, -inf
    %147 = vmax.xlane.f32.xlu0 %v145
    %v148 = vpop.xlane.xlu0 %147
    %149 = vmax.xlane.f32.xlu0 %v146
    %v150 = vpop.xlane.xlu0 %149
    %v151 = vsub.f32 %v145, %v148
    %v152 = vsub.f32 %v146, %v150
    %v153 = vmul.f32 %v151, 1.442695
    %v154 = vpow.pop %v153
    %v155 = vmul.f32 %v152, 1.442695
    %v156 = vpow.pop %v155
    %157 = vadd.xlane.f32.xlu0 %v154
    %v158 = vpop.xlane.xlu0 %157
    %159 = vadd.xlane.f32.xlu0 %v156
    %v160 = vpop.xlane.xlu0 %159
    %v161 = vrcp.pop %v158
    %v162 = vmul.f32 %v154, %v161
    %v163 = vrcp.pop %v160
    %v164 = vmul.f32 %v156, %v163
    %165 = vst [vmem:[%s2] sm:$0xff] %v162
    %166 = vst [vmem:[%s2 + $0x8] sm:$0xff] %v164
  $region17: #{teacher_forward.12} parent=0 // pred_fallthru
    _
  // Predicated region
  $region18: #{teacher_forward.12} parent=0 // pred_check
    _
  $region19: #{teacher_forward.12} parent=0 // pred_check_branch
    %168 = sbr.rel (0) target = $region21
  $region20: #{teacher_forward.12} parent=0 // pred_region
    _
  $region21: #{teacher_forward.12} parent=0 // pred_fallthru
    _
  // Predicated region
  $region22: #{teacher_forward.12} parent=0 // pred_check
    _
  $region23: #{teacher_forward.12} parent=0 // pred_check_branch
    %170 = sbr.rel (0) target = $region25
  $region24: #{teacher_forward.12} parent=0 // pred_region
    _
  $region25: #{teacher_forward.12} parent=0 // pred_fallthru
    _

// kernel: teacher_forward.13
$region0: #{teacher_forward.13}
  #allocation0 [shape = 'u32[]', space=smem, size = 0x4, offset = 0x4, fixed_abs, tag = 'smem constant byte address 0x4 - core index']
  #allocation1 [shape = 'u32[144,128]{1,0:T(1,128)}', space=vmem, size = 0x12000, scoped, tag = 'internal scratch']
  %s0 = inlined_call_operand.vmem [shape: bf16[32,128], index: 0, kind: input, shape index: {}]
  %s1 = inlined_call_operand.vmem [shape: bf16[128,128], index: 1, kind: input, shape index: {}]
  %s2 = inlined_call_operand.vmem [shape: f32[32,128], index: 2, kind: output, shape index: {}]
  %s3 = sld [smem:[#allocation0]]
  $region26: #{teacher_forward.13} parent=0
    _
  %s5 = ssub.s32 1, %s3
  %s6 = scalar_select 0, %s5, %s3
  // Predicated region
  $region2: #{teacher_forward.13} parent=0 // pred_check
    _
  $region3: #{teacher_forward.13} parent=0 // pred_check_branch
    %8 = sbr.rel (0) target = $region5
  $region4: #{teacher_forward.13} parent=0 // pred_region
    _
  $region5: #{teacher_forward.13} parent=0 // pred_fallthru
    _
  // Predicated region
  $region6: #{teacher_forward.13} parent=0 // pred_check
    _
  $region7: #{teacher_forward.13} parent=0 // pred_check_branch
    %10 = sbr.rel (0) target = $region9
  $region8: #{teacher_forward.13} parent=0 // pred_region
    _
  $region9: #{teacher_forward.13} parent=0 // pred_fallthru
    _
  %p12 = scmp.eq.s32.totalorder 0, 0
  // Predicated region
  $region10: #{teacher_forward.13} parent=0 // pred_check
    %p13 = pneg %p12
  $region11: #{teacher_forward.13} parent=0 // pred_check_branch
    %15 = sbr.rel (%p13) target = $region13
  $region12: #{teacher_forward.13} parent=0 // pred_region
    %16 = vst [vmem:[%s2] sm:$0xff] 0.0
    %17 = vst [vmem:[%s2 + $0x8] sm:$0xff] 0.0
    %18 = vst [vmem:[%s2 + $0x10] sm:$0xff] 0.0
    %19 = vst [vmem:[%s2 + $0x18] sm:$0xff] 0.0
  $region13: #{teacher_forward.13} parent=0 // pred_fallthru
    _
  %v20 = vld [vmem:[%s2] sm:$0xff]
  %v21 = vld [vmem:[%s2 + $0x8] sm:$0xff]
  %v22 = vld [vmem:[%s2 + $0x10] sm:$0xff]
  %v23 = vld [vmem:[%s2 + $0x18] sm:$0xff]
  %v24 = vld [vmem:[%s0] sm:$0xf]
  %v25 = vld [vmem:[%s0 + $0x4] sm:$0xf]
  %v26 = vld [vmem:[%s0 + $0x8] sm:$0xf]
  %v27 = vld [vmem:[%s0 + $0xc] sm:$0xf]
  %v28 = vld [vmem:[%s1] sm:$0xf]
  %v29 = vld [vmem:[%s1 + $0x4] sm:$0xf]
  %v30 = vld [vmem:[%s1 + $0x8] sm:$0xf]
  %v31 = vld [vmem:[%s1 + $0xc] sm:$0xf]
  %v32 = vld [vmem:[%s1 + $0x10] sm:$0xf]
  %v33 = vld [vmem:[%s1 + $0x14] sm:$0xf]
  %v34 = vld [vmem:[%s1 + $0x18] sm:$0xf]
  %v35 = vld [vmem:[%s1 + $0x1c] sm:$0xf]
  %v36 = vld [vmem:[%s1 + $0x20] sm:$0xf]
  %v37 = vld [vmem:[%s1 + $0x24] sm:$0xf]
  %v38 = vld [vmem:[%s1 + $0x28] sm:$0xf]
  %v39 = vld [vmem:[%s1 + $0x2c] sm:$0xf]
  %v40 = vld [vmem:[%s1 + $0x30] sm:$0xf]
  %v41 = vld [vmem:[%s1 + $0x34] sm:$0xf]
  %v42 = vld [vmem:[%s1 + $0x38] sm:$0xf]
  %v43 = vld [vmem:[%s1 + $0x3c] sm:$0xf]
  %v48 = vunpack.c.l.b16 %v24
  %v49 = vunpack.c.l.b16 %v25
  %v50 = vunpack.c.l.b16 %v26
  %v51 = vunpack.c.l.b16 %v27
  %v52 = vpack.c.b16 %v49, %v48
  %v53 = vpack.c.b16 %v51, %v50
  %v72 = vunpack.c.l.b16 %v28
  %v73 = vunpack.c.l.b16 %v29
  %v74 = vunpack.c.l.b16 %v30
  %v75 = vunpack.c.l.b16 %v31
  %v76 = vunpack.c.l.b16 %v32
  %v77 = vunpack.c.l.b16 %v33
  %v78 = vunpack.c.l.b16 %v34
  %v79 = vunpack.c.l.b16 %v35
  %v80 = vunpack.c.l.b16 %v36
  %v81 = vunpack.c.l.b16 %v37
  %v82 = vunpack.c.l.b16 %v38
  %v83 = vunpack.c.l.b16 %v39
  %v84 = vunpack.c.l.b16 %v40
  %v85 = vunpack.c.l.b16 %v41
  %v86 = vunpack.c.l.b16 %v42
  %v87 = vunpack.c.l.b16 %v43
  %v88 = vpack.c.b16 %v73, %v72
  %v89 = vpack.c.b16 %v75, %v74
  %v90 = vpack.c.b16 %v77, %v76
  %v91 = vpack.c.b16 %v79, %v78
  %v92 = vpack.c.b16 %v81, %v80
  %v93 = vpack.c.b16 %v83, %v82
  %v94 = vpack.c.b16 %v85, %v84
  %v95 = vpack.c.b16 %v87, %v86
  %104 = vmatprep.subr.bf16.mxu0 0
  %105 = vmatpush1.bf16.msra.mxu0 %v88
  %106 = vmatprep.subr.bf16.mxu0 0
  %107 = vmatpush1.bf16.msra.mxu0 %v89
  %108 = vmatprep.subr.bf16.mxu0 0
  %109 = vmatpush1.bf16.msra.mxu0 %v90
  %110 = vmatprep.subr.bf16.mxu0 0
  %111 = vmatpush1.bf16.msra.mxu0 %v91
  %112 = vmatprep.subr.bf16.mxu0 0
  %113 = vmatpush1.bf16.msra.mxu0 %v92
  %114 = vmatprep.subr.bf16.mxu0 0
  %115 = vmatpush1.bf16.msra.mxu0 %v93
  %116 = vmatprep.subr.bf16.mxu0 0
  %117 = vmatpush1.bf16.msra.mxu0 %v94
  %118 = vmatprep.subr.bf16.mxu0 0
  %119 = vmatpush1.bf16.msra.mxu0 %v95
  %120 = vmatprep.subr.bf16.mxu0 0
  %121 = vmatpush1.bf16.msra.mxu0 0
  %122 = vmatprep.subr.bf16.mxu0 0
  %123 = vmatpush1.bf16.msra.mxu0 0
  %124 = vmatprep.subr.bf16.mxu0 0
  %125 = vmatpush1.bf16.msra.mxu0 0
  %126 = vmatprep.subr.bf16.mxu0 0
  %127 = vmatpush1.bf16.msra.mxu0 0
  %128 = vmatprep.subr.bf16.mxu0 0
  %129 = vmatpush1.bf16.msra.mxu0 0
  %130 = vmatprep.subr.bf16.mxu0 0
  %131 = vmatpush1.bf16.msra.mxu0 0
  %132 = vmatprep.subr.bf16.mxu0 0
  %133 = vmatpush1.bf16.msra.mxu0 0
  %134 = vmatprep.subr.bf16.mxu0 0
  %135 = vmatpush1.bf16.msra.mxu0 0
  %136 = vmatprep.mubr.bf16.mxu0 0
  %137 = vmatmul.mubr.bf16.gmra.mrb[0].mxu0 %v52
  %v138 = vpop.f32.mrb[0].mxu0
  %v139 = vadd.f32 0.0, %v138
  %v140 = vpop.f32.mrb[0].mxu0
  %v141 = vpop.f32.mrb[0].mxu0
  %v142 = vadd.f32 0.0, %v141
  %v143 = vpop.f32.mrb[0].mxu0
  %144 = vmatprep.mubr.bf16.mxu0 0
  %145 = vmatmul.mubr.bf16.gmra.mrb[0].mxu0 %v53
  %v146 = vpop.f32.mrb[0].mxu0
  %v147 = vadd.f32 0.0, %v146
  %v148 = vpop.f32.mrb[0].mxu0
  %v149 = vpop.f32.mrb[0].mxu0
  %v150 = vadd.f32 0.0, %v149
  %v151 = vpop.f32.mrb[0].mxu0
  %152 = vdwg.mxu0
  %v153 = vadd.f32 %v20, %v139
  %v154 = vadd.f32 %v21, %v142
  %v155 = vadd.f32 %v22, %v147
  %v156 = vadd.f32 %v23, %v150
  %157 = vst [vmem:[%s2] sm:$0xff] %v153
  %158 = vst [vmem:[%s2 + $0x8] sm:$0xff] %v154
  %159 = vst [vmem:[%s2 + $0x10] sm:$0xff] %v155
  %160 = vst [vmem:[%s2 + $0x18] sm:$0xff] %v156
  // Predicated region
  $region14: #{teacher_forward.13} parent=0 // pred_check
    %p161 = pneg %p12
  $region15: #{teacher_forward.13} parent=0 // pred_check_branch
    %163 = sbr.rel (%p161) target = $region17
  $region16: #{teacher_forward.13} parent=0 // pred_region
    %v164 = vld [vmem:[%s2] sm:$0xff]
    %v165 = vld [vmem:[%s2 + $0x8] sm:$0xff]
    %v166 = vld [vmem:[%s2 + $0x10] sm:$0xff]
    %v167 = vld [vmem:[%s2 + $0x18] sm:$0xff]
    %v168 = vlaneseq
    %v169 = vand.u32 %v168, 127
    %vm170 = vcmp.lt.s32.totalorder %v169, 32
    %v171 = vsel %vm170, %v164, -inf
    %v172 = vsel %vm170, %v165, -inf
    %v173 = vsel %vm170, %v166, -inf
    %v174 = vsel %vm170, %v167, -inf
    %175 = vmax.xlane.f32.xlu0 %v171
    %v176 = vpop.xlane.xlu0 %175
    %177 = vmax.xlane.f32.xlu0 %v172
    %v178 = vpop.xlane.xlu0 %177
    %179 = vmax.xlane.f32.xlu0 %v173
    %v180 = vpop.xlane.xlu0 %179
    %181 = vmax.xlane.f32.xlu0 %v174
    %v182 = vpop.xlane.xlu0 %181
    %v183 = vsub.f32 %v171, %v176
    %v184 = vsub.f32 %v172, %v178
    %v185 = vsub.f32 %v173, %v180
    %v186 = vsub.f32 %v174, %v182
    %v187 = vmul.f32 %v183, 1.442695
    %v188 = vpow.pop %v187
    %v189 = vmul.f32 %v184, 1.442695
    %v190 = vpow.pop %v189
    %v191 = vmul.f32 %v185, 1.442695
    %v192 = vpow.pop %v191
    %v193 = vmul.f32 %v186, 1.442695
    %v194 = vpow.pop %v193
    %195 = vadd.xlane.f32.xlu0 %v188
    %v196 = vpop.xlane.xlu0 %195
    %197 = vadd.xlane.f32.xlu0 %v190
    %v198 = vpop.xlane.xlu0 %197
    %199 = vadd.xlane.f32.xlu0 %v192
    %v200 = vpop.xlane.xlu0 %199
    %201 = vadd.xlane.f32.xlu0 %v194
    %v202 = vpop.xlane.xlu0 %201
    %v203 = vrcp.pop %v196
    %v204 = vmul.f32 %v188, %v203
    %v205 = vrcp.pop %v198
    %v206 = vmul.f32 %v190, %v205
    %v207 = vrcp.pop %v200
    %v208 = vmul.f32 %v192, %v207
    %v209 = vrcp.pop %v202
    %v210 = vmul.f32 %v194, %v209
    %211 = vst [vmem:[%s2] sm:$0xff] %v204
    %212 = vst [vmem:[%s2 + $0x8] sm:$0xff] %v206
    %213 = vst [vmem:[%s2 + $0x10] sm:$0xff] %v208
    %214 = vst [vmem:[%s2 + $0x18] sm:$0xff] %v210
  $region17: #{teacher_forward.13} parent=0 // pred_fallthru
    _
  // Predicated region
  $region18: #{teacher_forward.13} parent=0 // pred_check
    _
  $region19: #{teacher_forward.13} parent=0 // pred_check_branch
    %216 = sbr.rel (0) target = $region21
  $region20: #{teacher_forward.13} parent=0 // pred_region
    _
  $region21: #{teacher_forward.13} parent=0 // pred_fallthru
    _
  // Predicated region
  $region22: #{teacher_forward.13} parent=0 // pred_check
    _
  $region23: #{teacher_forward.13} parent=0 // pred_check_branch
    %218 = sbr.rel (0) target = $region25
  $region24: #{teacher_forward.13} parent=0 // pred_region
    _
  $region25: #{teacher_forward.13} parent=0 // pred_fallthru
    _

// kernel: teacher_forward.15
$region0: #{teacher_forward.15}
  #allocation0 [shape = 'u32[]', space=smem, size = 0x4, offset = 0x4, fixed_abs, tag = 'smem constant byte address 0x4 - core index']
  #allocation1 [shape = 'u32[144,128]{1,0:T(1,128)}', space=vmem, size = 0x12000, scoped, tag = 'internal scratch']
  %s0 = inlined_call_operand.vmem [shape: f32[24,32], index: 0, kind: input, shape index: {}]
  %s1 = inlined_call_operand.vmem [shape: f32[24,32], index: 1, kind: input, shape index: {}]
  %s2 = inlined_call_operand.vmem [shape: f32[24,32], index: 2, kind: input, shape index: {}]
  %s3 = inlined_call_operand.vmem [shape: f32[24,32], index: 3, kind: output, shape index: {}]
  %s4 = sld [smem:[#allocation0]]
  $region22: #{teacher_forward.15} parent=0
    _
  %s6 = ssub.s32 1, %s4
  %s7 = scalar_select 0, %s6, %s4
  // Predicated region
  $region2: #{teacher_forward.15} parent=0 // pred_check
    _
  $region3: #{teacher_forward.15} parent=0 // pred_check_branch
    %9 = sbr.rel (0) target = $region5
  $region4: #{teacher_forward.15} parent=0 // pred_region
    _
  $region5: #{teacher_forward.15} parent=0 // pred_fallthru
    _
  // Predicated region
  $region6: #{teacher_forward.15} parent=0 // pred_check
    _
  $region7: #{teacher_forward.15} parent=0 // pred_check_branch
    %11 = sbr.rel (0) target = $region9
  $region8: #{teacher_forward.15} parent=0 // pred_region
    _
  $region9: #{teacher_forward.15} parent=0 // pred_fallthru
    _
  // Predicated region
  $region10: #{teacher_forward.15} parent=0 // pred_check
    _
  $region11: #{teacher_forward.15} parent=0 // pred_check_branch
    %13 = sbr.rel (0) target = $region13
  $region12: #{teacher_forward.15} parent=0 // pred_region
    _
  $region13: #{teacher_forward.15} parent=0 // pred_fallthru
    _
  %v14 = vld [vmem:[%s1] sm:$0xff]
  %v15 = vld [vmem:[%s1 + $0x8] sm:$0xff]
  %v16 = vld [vmem:[%s1 + $0x10] sm:$0xff]
  %v17 = vld [vmem:[%s2] sm:$0xff]
  %v18 = vld [vmem:[%s2 + $0x8] sm:$0xff]
  %v19 = vld [vmem:[%s2 + $0x10] sm:$0xff]
  %v20 = vmul.f32 %v14, %v14
  %v21 = vmul.f32 %v15, %v15
  %v22 = vmul.f32 %v16, %v16
  %vm23 = vcmask 261120
  %v24 = vsel %vm23, %v20, 0.0
  %25 = vadd.xlane.f32.xlu0 %v24
  %v26 = vpop.xlane.xlu0 %25
  %v27 = vsel %vm23, %v21, 0.0
  %28 = vadd.xlane.f32.xlu0 %v27
  %v29 = vpop.xlane.xlu0 %28
  %v30 = vsel %vm23, %v22, 0.0
  %31 = vadd.xlane.f32.xlu0 %v30
  %v32 = vpop.xlane.xlu0 %31
  %v33 = vmax.f32 %v26, 1e-24
  %v34 = vmax.f32 %v29, 1e-24
  %v35 = vmax.f32 %v32, 1e-24
  %v36 = vrsqrt.pop %v33
  %v37 = vrsqrt.pop %v34
  %v38 = vrsqrt.pop %v35
  %v39 = vmul.f32 %v17, %v17
  %v40 = vmul.f32 %v18, %v18
  %v41 = vmul.f32 %v19, %v19
  %v42 = vsel %vm23, %v39, 0.0
  %43 = vadd.xlane.f32.xlu0 %v42
  %v44 = vpop.xlane.xlu0 %43
  %v45 = vsel %vm23, %v40, 0.0
  %46 = vadd.xlane.f32.xlu0 %v45
  %v47 = vpop.xlane.xlu0 %46
  %v48 = vsel %vm23, %v41, 0.0
  %49 = vadd.xlane.f32.xlu0 %v48
  %v50 = vpop.xlane.xlu0 %49
  %v51 = vmax.f32 %v44, 1e-24
  %v52 = vmax.f32 %v47, 1e-24
  %v53 = vmax.f32 %v50, 1e-24
  %v54 = vrsqrt.pop %v51
  %v55 = vrsqrt.pop %v52
  %v56 = vrsqrt.pop %v53
  %v57 = vld [vmem:[%s0] sm:$0xff]
  %v58 = vld [vmem:[%s0 + $0x8] sm:$0xff]
  %v59 = vld [vmem:[%s0 + $0x10] sm:$0xff]
  %v60 = vmul.f32 %v57, 0.33333334
  %v61 = vmul.f32 %v58, 0.33333334
  %v62 = vmul.f32 %v59, 0.33333334
  %v63 = vmul.f32 %v14, %v36
  %v64 = vmul.f32 %v15, %v37
  %v65 = vmul.f32 %v16, %v38
  %v66 = vmul.f32 %v63, 0.55
  %v67 = vmul.f32 %v64, 0.55
  %v68 = vmul.f32 %v65, 0.55
  %v69 = vadd.f32 %v60, %v66
  %v70 = vadd.f32 %v61, %v67
  %v71 = vadd.f32 %v62, %v68
  %v72 = vmul.f32 %v17, %v54
  %v73 = vmul.f32 %v18, %v55
  %v74 = vmul.f32 %v19, %v56
  %v75 = vmul.f32 %v72, 0.55
  %v76 = vmul.f32 %v73, 0.55
  %v77 = vmul.f32 %v74, 0.55
  %v78 = vadd.f32 %v69, %v75
  %v79 = vadd.f32 %v70, %v76
  %v80 = vadd.f32 %v71, %v77
  %81 = vst.msk [vmem:[%s3] sm:$0xff] %vm23, %v78
  %82 = vst.msk [vmem:[%s3 + $0x8] sm:$0xff] %vm23, %v79
  %83 = vst.msk [vmem:[%s3 + $0x10] sm:$0xff] %vm23, %v80
  // Predicated region
  $region14: #{teacher_forward.15} parent=0 // pred_check
    _
  $region15: #{teacher_forward.15} parent=0 // pred_check_branch
    %85 = sbr.rel (0) target = $region17
  $region16: #{teacher_forward.15} parent=0 // pred_region
    _
  $region17: #{teacher_forward.15} parent=0 // pred_fallthru
    _
  // Predicated region
  $region18: #{teacher_forward.15} parent=0 // pred_check
    _
  $region19: #{teacher_forward.15} parent=0 // pred_check_branch
    %87 = sbr.rel (0) target = $region21
  $region20: #{teacher_forward.15} parent=0 // pred_region
    _
  $region21: #{teacher_forward.15} parent=0 // pred_fallthru
    _

// kernel: teacher_forward.14
$region0: #{teacher_forward.14}
  #allocation0 [shape = 'u32[]', space=smem, size = 0x4, offset = 0x4, fixed_abs, tag = 'smem constant byte address 0x4 - core index']
  #allocation1 [shape = 'u32[144,128]{1,0:T(1,128)}', space=vmem, size = 0x12000, scoped, tag = 'internal scratch']
  %s0 = inlined_call_operand.vmem [shape: f32[16,32], index: 0, kind: input, shape index: {}]
  %s1 = inlined_call_operand.vmem [shape: f32[16,32], index: 1, kind: input, shape index: {}]
  %s2 = inlined_call_operand.vmem [shape: f32[16,32], index: 2, kind: input, shape index: {}]
  %s3 = inlined_call_operand.vmem [shape: f32[16,32], index: 3, kind: output, shape index: {}]
  %s4 = sld [smem:[#allocation0]]
  $region22: #{teacher_forward.14} parent=0
    _
  %s6 = ssub.s32 1, %s4
  %s7 = scalar_select 0, %s6, %s4
  // Predicated region
  $region2: #{teacher_forward.14} parent=0 // pred_check
    _
  $region3: #{teacher_forward.14} parent=0 // pred_check_branch
    %9 = sbr.rel (0) target = $region5
  $region4: #{teacher_forward.14} parent=0 // pred_region
    _
  $region5: #{teacher_forward.14} parent=0 // pred_fallthru
    _
  // Predicated region
  $region6: #{teacher_forward.14} parent=0 // pred_check
    _
  $region7: #{teacher_forward.14} parent=0 // pred_check_branch
    %11 = sbr.rel (0) target = $region9
  $region8: #{teacher_forward.14} parent=0 // pred_region
    _
  $region9: #{teacher_forward.14} parent=0 // pred_fallthru
    _
  // Predicated region
  $region10: #{teacher_forward.14} parent=0 // pred_check
    _
  $region11: #{teacher_forward.14} parent=0 // pred_check_branch
    %13 = sbr.rel (0) target = $region13
  $region12: #{teacher_forward.14} parent=0 // pred_region
    _
  $region13: #{teacher_forward.14} parent=0 // pred_fallthru
    _
  %v14 = vld [vmem:[%s1] sm:$0xff]
  %v15 = vld [vmem:[%s1 + $0x8] sm:$0xff]
  %v16 = vld [vmem:[%s2] sm:$0xff]
  %v17 = vld [vmem:[%s2 + $0x8] sm:$0xff]
  %v18 = vmul.f32 %v14, %v14
  %v19 = vmul.f32 %v15, %v15
  %vm20 = vcmask 261120
  %v21 = vsel %vm20, %v18, 0.0
  %22 = vadd.xlane.f32.xlu0 %v21
  %v23 = vpop.xlane.xlu0 %22
  %v24 = vsel %vm20, %v19, 0.0
  %25 = vadd.xlane.f32.xlu0 %v24
  %v26 = vpop.xlane.xlu0 %25
  %v27 = vmax.f32 %v23, 1e-24
  %v28 = vmax.f32 %v26, 1e-24
  %v29 = vrsqrt.pop %v27
  %v30 = vrsqrt.pop %v28
  %v31 = vmul.f32 %v16, %v16
  %v32 = vmul.f32 %v17, %v17
  %v33 = vsel %vm20, %v31, 0.0
  %34 = vadd.xlane.f32.xlu0 %v33
  %v35 = vpop.xlane.xlu0 %34
  %v36 = vsel %vm20, %v32, 0.0
  %37 = vadd.xlane.f32.xlu0 %v36
  %v38 = vpop.xlane.xlu0 %37
  %v39 = vmax.f32 %v35, 1e-24
  %v40 = vmax.f32 %v38, 1e-24
  %v41 = vrsqrt.pop %v39
  %v42 = vrsqrt.pop %v40
  %v43 = vld [vmem:[%s0] sm:$0xff]
  %v44 = vld [vmem:[%s0 + $0x8] sm:$0xff]
  %v45 = vmul.f32 %v43, 0.33333334
  %v46 = vmul.f32 %v44, 0.33333334
  %v47 = vmul.f32 %v14, %v29
  %v48 = vmul.f32 %v15, %v30
  %v49 = vmul.f32 %v47, 0.55
  %v50 = vmul.f32 %v48, 0.55
  %v51 = vadd.f32 %v45, %v49
  %v52 = vadd.f32 %v46, %v50
  %v53 = vmul.f32 %v16, %v41
  %v54 = vmul.f32 %v17, %v42
  %v55 = vmul.f32 %v53, 0.55
  %v56 = vmul.f32 %v54, 0.55
  %v57 = vadd.f32 %v51, %v55
  %v58 = vadd.f32 %v52, %v56
  %59 = vst.msk [vmem:[%s3] sm:$0xff] %vm20, %v57
  %60 = vst.msk [vmem:[%s3 + $0x8] sm:$0xff] %vm20, %v58
  // Predicated region
  $region14: #{teacher_forward.14} parent=0 // pred_check
    _
  $region15: #{teacher_forward.14} parent=0 // pred_check_branch
    %62 = sbr.rel (0) target = $region17
  $region16: #{teacher_forward.14} parent=0 // pred_region
    _
  $region17: #{teacher_forward.14} parent=0 // pred_fallthru
    _
  // Predicated region
  $region18: #{teacher_forward.14} parent=0 // pred_check
    _
  $region19: #{teacher_forward.14} parent=0 // pred_check_branch
    %64 = sbr.rel (0) target = $region21
  $region20: #{teacher_forward.14} parent=0 // pred_region
    _
  $region21: #{teacher_forward.14} parent=0 // pred_fallthru
    _

</llo_original>
